<compile_context>
chip_gen: v5e
topology: v5e:2x2
jax: 0.10.0
libtpu: 0.0.40
codegen_flags: <defaults>
</compile_context>

<pallas_src>
import math

import jax
import jax.numpy as jnp
from jax.experimental import pallas as pl
from jax.experimental.pallas import tpu as pltpu


def make_lstm_model_kernel(T, B, input_size, H, num_layers):
    """Builds the fused forward kernel for fixed static shapes."""
    del input_size  # shapes are carried by the refs

    def lstm_gates(g, c_prev):
        # One sigmoid + one tanh over the full (B, 4H) tile (EUP), then slice.
        sg = jax.nn.sigmoid(g)
        tg = jnp.tanh(g)
        i_g = sg[:, 0:H]
        f_g = sg[:, H:2 * H]
        g_g = tg[:, 2 * H:3 * H]
        o_g = sg[:, 3 * H:4 * H]
        c_new = f_g * c_prev + i_g * g_g
        h_new = o_g * jnp.tanh(c_new)
        return h_new, c_new

    def kernel(*refs):
        idx = 0
        x_ref = refs[idx]; idx += 1                       # (T*B, Din)
        w_ih0_ref = refs[idx]; idx += 1                   # (Din, 4H)
        w_hh0_ref = refs[idx]; idx += 1                   # (H, 4H)
        b0_ref = refs[idx]; idx += 1                      # (1, 4H)
        stk = []
        for _ in range(num_layers - 1):
            stk.append((refs[idx], refs[idx + 1]))        # (2H, 4H), (1, 4H)
            idx += 2
        (w_fc, b_fc, w_h1, b_h1,
         wc2, bc2, wc3, bc3, wd2, bd2) = refs[idx:idx + 10]
        idx += 10
        out_ref = refs[idx]                               # (T, 128)

        # ---- hoisted layer-0 input projection: one matmul for all timesteps ----
        proj0 = (jnp.dot(x_ref[...], w_ih0_ref[...],
                         preferred_element_type=jnp.float32) + b0_ref[...])  # (T*B, 4H)
        w_hh0 = w_hh0_ref[...]
        w_stacks = [w[...] for (w, _) in stk]
        b_stacks = [b[...] for (_, b) in stk]

        h = [jnp.zeros((B, H), jnp.float32) for _ in range(num_layers)]
        c = [jnp.zeros((B, H), jnp.float32) for _ in range(num_layers)]

        rows = []
        # Fully unrolled time loop (T is small & static): the scheduler sees the
        # whole DAG, so the per-layer recurrences overlap (wavefront).
        for t in range(T):
            # layer 0: recurrent matmul only; input projection already hoisted.
            g0 = proj0[t * B:(t + 1) * B, :] + jnp.dot(
                h[0], w_hh0, preferred_element_type=jnp.float32)
            h[0], c[0] = lstm_gates(g0, c[0])
            # layers 1..L-1: one fused [x_t, h] @ [W_ih; W_hh] matmul per step.
            for l in range(1, num_layers):
                xin = jnp.concatenate([h[l - 1], h[l]], axis=-1)        # (B, 2H)
                gl = jnp.dot(xin, w_stacks[l - 1],
                             preferred_element_type=jnp.float32) + b_stacks[l - 1]
                h[l], c[l] = lstm_gates(gl, c[l])
            # only the last batch element of the last layer is ever used downstream
            rows.append(h[num_layers - 1][B - 1:B, :])                  # (1, H)

        seq_h = jnp.concatenate(rows, axis=0)                            # (T, H)
        feat = jnp.dot(seq_h, w_fc[...],
                       preferred_element_type=jnp.float32) + b_fc[...]   # (T, 50)

        # ---- fused + lane-padded first layers of both heads: (T,50)@(50,256) ----
        h1 = jnp.maximum(
            jnp.dot(feat, w_h1[...], preferred_element_type=jnp.float32)
            + b_h1[...], 0.0)                                            # (T, 256)
        c1 = h1[:, 0:128]          # class head (lanes 100:128 are exact zeros)
        d1 = h1[:, 128:256]        # domain head (lanes 100:128 are exact zeros)

        # class classifier (dropout = identity in eval mode)
        c2 = jnp.maximum(
            jnp.dot(c1, wc2[...], preferred_element_type=jnp.float32)
            + bc2[...], 0.0)                                             # (T, 128)
        cls = jnp.dot(c2, wc3[...],
                      preferred_element_type=jnp.float32) + bc3[...]     # (T, 1)

        # domain classifier (gradient reversal is identity forward)
        d2 = jnp.dot(d1, wd2[...],
                     preferred_element_type=jnp.float32) + bd2[...]      # (T, 2)
        # nn.LogSoftmax(dim=0): log-softmax over the sequence axis
        m = jnp.max(d2, axis=0, keepdims=True)
        lse = jnp.log(jnp.sum(jnp.exp(d2 - m), axis=0, keepdims=True)) + m
        dom = d2 - lse                                                   # (T, 2)

        # ---- single lane-dense output slab: class in lane 0, domain in lanes 1-2
        out_ref[...] = jnp.zeros((T, 128), jnp.float32)
        out_ref[:, 0:1] = cls
        out_ref[:, 1:3] = dom

    return kernel


def lstm_model_forward(x, params, alpha):
    # alpha only flips gradients in ReverseLayerF; forward pass is identity.
    del alpha
    T, B, Din = x.shape
    H = params["hidden_size"]
    L = params["num_layers"]

    def pad_to(a, rows, cols):
        return jnp.pad(a, ((0, rows - a.shape[0]), (0, cols - a.shape[1])))

    # Layout plumbing only (no compute is moved out of the kernel):
    #  - input flattened to (T*B, Din) for the hoisted layer-0 projection
    #  - W_ih/W_hh of layers >0 stacked for the fused per-step matmul
    #  - head weights zero-padded / concatenated so splits land on 128-lane
    #    boundaries (numerically exact: padded lanes are identically zero).
    inputs = [x.reshape(T * B, Din),
              params["w_ih"][0], params["w_hh"][0], params["b"][0]]
    for l in range(1, L):
        inputs += [jnp.concatenate([params["w_ih"][l], params["w_hh"][l]], axis=0),
                   params["b"][l]]
    w_h1 = jnp.concatenate([pad_to(params["wc1"], 50, 128),
                            pad_to(params["wd1"], 50, 128)], axis=1)   # (50, 256)
    b_h1 = jnp.concatenate([pad_to(params["bc1"], 1, 128),
                            pad_to(params["bd1"], 1, 128)], axis=1)    # (1, 256)
    inputs += [params["w_fc"], params["b_fc"], w_h1, b_h1,
               pad_to(params["wc2"], 128, 128), pad_to(params["bc2"], 1, 128),
               pad_to(params["wc3"], 128, 1), params["bc3"],
               pad_to(params["wd2"], 128, 2), params["bd2"]]

    kernel = make_lstm_model_kernel(T, B, Din, H, L)
    vmem = pl.BlockSpec(memory_space=pltpu.MemorySpace.VMEM)
    slab = pl.pallas_call(
        kernel,
        out_shape=jax.ShapeDtypeStruct((T, 128), jnp.float32),
        in_specs=[vmem] * len(inputs),
        out_specs=vmem,
    )(*inputs)
    return slab[:, 0:1], slab[:, 1:3]


# ---------------- deterministic parameter construction ----------------
def init_params(key, input_size, hidden_size, num_layers):
    def u(k, shape, bound):
        return jax.random.uniform(k, shape, jnp.float32, -bound, bound)

    p = {"hidden_size": hidden_size, "num_layers": num_layers,
         "w_ih": [], "w_hh": [], "b": []}
    k = key
    bound = 1.0 / math.sqrt(hidden_size)
    for l in range(num_layers):
        in_l = input_size if l == 0 else hidden_size
        k, k1, k2, k3, k4 = jax.random.split(k, 5)
        p["w_ih"].append(u(k1, (in_l, 4 * hidden_size), bound))
        p["w_hh"].append(u(k2, (hidden_size, 4 * hidden_size), bound))
        # fold b_ih + b_hh into a single bias, shape (1, 4H)
        p["b"].append(u(k3, (1, 4 * hidden_size), bound)
                      + u(k4, (1, 4 * hidden_size), bound))

    def linear(k, fan_in, fan_out):
        k1, k2 = jax.random.split(k)
        bd = 1.0 / math.sqrt(fan_in)
        return u(k1, (fan_in, fan_out), bd), u(k2, (1, fan_out), bd)

    k, *ks = jax.random.split(k, 7)
    p["w_fc"], p["b_fc"] = linear(ks[0], hidden_size, 50)
    p["wc1"], p["bc1"] = linear(ks[1], 50, 100)
    p["wc2"], p["bc2"] = linear(ks[2], 100, 100)
    p["wc3"], p["bc3"] = linear(ks[3], 100, 1)
    p["wd1"], p["bd1"] = linear(ks[4], 50, 100)
    p["wd2"], p["bd2"] = linear(ks[5], 100, 2)
    return p


# ---------------- pure-JAX reference (semantics check) ----------------
def ref_forward(x, p):
    T, B, _ = x.shape
    H = p["hidden_size"]
    seq = x
    for l in range(p["num_layers"]):
        w_ih, w_hh, b = p["w_ih"][l], p["w_hh"][l], p["b"][l]
        h = jnp.zeros((B, H), jnp.float32)
        c = jnp.zeros((B, H), jnp.float32)
        outs = []
        for t in range(T):
            g = seq[t] @ w_ih + h @ w_hh + b
            i = jax.nn.sigmoid(g[:, :H])
            f = jax.nn.sigmoid(g[:, H:2 * H])
            gg = jnp.tanh(g[:, 2 * H:3 * H])
            o = jax.nn.sigmoid(g[:, 3 * H:])
            c = f * c + i * gg
            h = o * jnp.tanh(c)
            outs.append(h)
        seq = jnp.stack(outs, axis=0)
    feat = (seq @ p["w_fc"] + p["b_fc"])[:, -1, :]          # (T, 50)
    c1 = jax.nn.relu(feat @ p["wc1"] + p["bc1"])
    c2 = jax.nn.relu(c1 @ p["wc2"] + p["bc2"])
    class_out = c2 @ p["wc3"] + p["bc3"]
    d1 = jax.nn.relu(feat @ p["wd1"] + p["bd1"])
    d2 = d1 @ p["wd2"] + p["bd2"]
    domain_out = jax.nn.log_softmax(d2, axis=0)
    return class_out, domain_out


if __name__ == "__main__":
    seq_len, batch, input_size, hidden_size, num_layers = 8, 2, 4, 32, 2
    alpha = 0.7

    key = jax.random.PRNGKey(0)
    k_x, k_p = jax.random.split(key)
    x = jax.random.normal(k_x, (seq_len, batch, input_size), jnp.float32)
    params = init_params(k_p, input_size, hidden_size, num_layers)

    class_out, domain_out = lstm_model_forward(x, params, alpha)
    class_out = jax.block_until_ready(class_out)
    domain_out = jax.block_until_ready(domain_out)

    ref_c, ref_d = ref_forward(x, params)
    assert class_out.shape == (seq_len, 1) and domain_out.shape == (seq_len, 2)
    assert jnp.allclose(class_out, ref_c, atol=1e-4, rtol=1e-4)
    assert jnp.allclose(domain_out, ref_d, atol=1e-4, rtol=1e-4)
    print("KERNEL_OK")
</pallas_src>

<mosaic_0001>
module attributes {stable_mosaic.version = 11 : i64} {
  func.func @kernel(%arg0: memref<16x4xf32, #tpu.memory_space<vmem>>, %arg1: memref<4x128xf32, #tpu.memory_space<vmem>>, %arg2: memref<32x128xf32, #tpu.memory_space<vmem>>, %arg3: memref<1x128xf32, #tpu.memory_space<vmem>>, %arg4: memref<64x128xf32, #tpu.memory_space<vmem>>, %arg5: memref<1x128xf32, #tpu.memory_space<vmem>>, %arg6: memref<32x50xf32, #tpu.memory_space<vmem>>, %arg7: memref<1x50xf32, #tpu.memory_space<vmem>>, %arg8: memref<50x256xf32, #tpu.memory_space<vmem>>, %arg9: memref<1x256xf32, #tpu.memory_space<vmem>>, %arg10: memref<128x128xf32, #tpu.memory_space<vmem>>, %arg11: memref<1x128xf32, #tpu.memory_space<vmem>>, %arg12: memref<128x1xf32, #tpu.memory_space<vmem>>, %arg13: memref<1x1xf32, #tpu.memory_space<vmem>>, %arg14: memref<128x2xf32, #tpu.memory_space<vmem>>, %arg15: memref<1x2xf32, #tpu.memory_space<vmem>>, %arg16: memref<8x128xf32, #tpu.memory_space<vmem>>) attributes {dimension_semantics = [], scalar_prefetch = 0 : i64, scratch_operands = 0 : i64, tpu.core_type = #tpu.core_type<tc>} {
    %c0 = arith.constant 0 : index
    %c0_0 = arith.constant 0 : index
    %0 = vector.load %arg0[%c0, %c0_0] : memref<16x4xf32, #tpu.memory_space<vmem>>, vector<16x4xf32>
    %c0_1 = arith.constant 0 : index
    %c0_2 = arith.constant 0 : index
    %1 = vector.load %arg1[%c0_1, %c0_2] : memref<4x128xf32, #tpu.memory_space<vmem>>, vector<4x128xf32>
    %cst = arith.constant dense<0.000000e+00> : vector<16x128xf32>
    %2 = tpu.matmul %0, %1, %cst {dimension_numbers = #tpu.dot_dimension_numbers<[1], [0], [0], [1], [0, 0, 1, 1], [], []>} : vector<16x4xf32>, vector<4x128xf32>, vector<16x128xf32> -> vector<16x128xf32>
    %c0_3 = arith.constant 0 : index
    %c0_4 = arith.constant 0 : index
    %3 = vector.load %arg3[%c0_3, %c0_4] : memref<1x128xf32, #tpu.memory_space<vmem>>, vector<1x128xf32>
    %4 = vector.broadcast %3 : vector<1x128xf32> to vector<16x128xf32>
    %5 = arith.addf %2, %4 : vector<16x128xf32>
    %c0_5 = arith.constant 0 : index
    %c0_6 = arith.constant 0 : index
    %6 = vector.load %arg2[%c0_5, %c0_6] : memref<32x128xf32, #tpu.memory_space<vmem>>, vector<32x128xf32>
    %c0_7 = arith.constant 0 : index
    %c0_8 = arith.constant 0 : index
    %7 = vector.load %arg4[%c0_7, %c0_8] : memref<64x128xf32, #tpu.memory_space<vmem>>, vector<64x128xf32>
    %c0_9 = arith.constant 0 : index
    %c0_10 = arith.constant 0 : index
    %8 = vector.load %arg5[%c0_9, %c0_10] : memref<1x128xf32, #tpu.memory_space<vmem>>, vector<1x128xf32>
    %cst_11 = arith.constant 0.000000e+00 : f32
    %9 = vector.broadcast %cst_11 : f32 to vector<2x32xf32>
    %cst_12 = arith.constant 0.000000e+00 : f32
    %10 = vector.broadcast %cst_12 : f32 to vector<2x32xf32>
    %cst_13 = arith.constant 0.000000e+00 : f32
    %11 = vector.broadcast %cst_13 : f32 to vector<2x32xf32>
    %cst_14 = arith.constant 0.000000e+00 : f32
    %12 = vector.broadcast %cst_14 : f32 to vector<2x32xf32>
    %13 = vector.extract_strided_slice %5 {offsets = [0, 0], sizes = [2, 128], strides = [1, 1]} : vector<16x128xf32> to vector<2x128xf32>
    %cst_15 = arith.constant dense<0.000000e+00> : vector<2x128xf32>
    %14 = tpu.matmul %9, %6, %cst_15 {dimension_numbers = #tpu.dot_dimension_numbers<[1], [0], [0], [1], [0, 0, 1, 1], [], []>} : vector<2x32xf32>, vector<32x128xf32>, vector<2x128xf32> -> vector<2x128xf32>
    %15 = arith.addf %13, %14 : vector<2x128xf32>
    %16 = arith.negf %15 : vector<2x128xf32>
    %17 = math.exp %16 : vector<2x128xf32>
    %cst_16 = arith.constant 1.000000e+00 : f32
    %18 = vector.broadcast %cst_16 : f32 to vector<2x128xf32>
    %19 = arith.addf %18, %17 : vector<2x128xf32>
    %20 = arith.divf %18, %19 : vector<2x128xf32>
    %21 = math.tanh %15 : vector<2x128xf32>
    %22 = vector.extract_strided_slice %20 {offsets = [0, 0], sizes = [2, 32], strides = [1, 1]} : vector<2x128xf32> to vector<2x32xf32>
    %23 = vector.extract_strided_slice %20 {offsets = [0, 32], sizes = [2, 32], strides = [1, 1]} : vector<2x128xf32> to vector<2x32xf32>
    %24 = vector.extract_strided_slice %21 {offsets = [0, 64], sizes = [2, 32], strides = [1, 1]} : vector<2x128xf32> to vector<2x32xf32>
    %25 = vector.extract_strided_slice %20 {offsets = [0, 96], sizes = [2, 32], strides = [1, 1]} : vector<2x128xf32> to vector<2x32xf32>
    %26 = arith.mulf %23, %11 : vector<2x32xf32>
    %27 = arith.mulf %22, %24 : vector<2x32xf32>
    %28 = arith.addf %26, %27 : vector<2x32xf32>
    %29 = math.tanh %28 : vector<2x32xf32>
    %30 = arith.mulf %25, %29 : vector<2x32xf32>
    %31 = tpu.concatenate %30, %10 in 1 : vector<2x32xf32>, vector<2x32xf32> -> vector<2x64xf32>
    %cst_17 = arith.constant dense<0.000000e+00> : vector<2x128xf32>
    %32 = tpu.matmul %31, %7, %cst_17 {dimension_numbers = #tpu.dot_dimension_numbers<[1], [0], [0], [1], [0, 0, 1, 1], [], []>} : vector<2x64xf32>, vector<64x128xf32>, vector<2x128xf32> -> vector<2x128xf32>
    %33 = vector.broadcast %8 : vector<1x128xf32> to vector<2x128xf32>
    %34 = arith.addf %32, %33 : vector<2x128xf32>
    %35 = arith.negf %34 : vector<2x128xf32>
    %36 = math.exp %35 : vector<2x128xf32>
    %cst_18 = arith.constant 1.000000e+00 : f32
    %37 = vector.broadcast %cst_18 : f32 to vector<2x128xf32>
    %38 = arith.addf %37, %36 : vector<2x128xf32>
    %39 = arith.divf %37, %38 : vector<2x128xf32>
    %40 = math.tanh %34 : vector<2x128xf32>
    %41 = vector.extract_strided_slice %39 {offsets = [0, 0], sizes = [2, 32], strides = [1, 1]} : vector<2x128xf32> to vector<2x32xf32>
    %42 = vector.extract_strided_slice %39 {offsets = [0, 32], sizes = [2, 32], strides = [1, 1]} : vector<2x128xf32> to vector<2x32xf32>
    %43 = vector.extract_strided_slice %40 {offsets = [0, 64], sizes = [2, 32], strides = [1, 1]} : vector<2x128xf32> to vector<2x32xf32>
    %44 = vector.extract_strided_slice %39 {offsets = [0, 96], sizes = [2, 32], strides = [1, 1]} : vector<2x128xf32> to vector<2x32xf32>
    %45 = arith.mulf %42, %12 : vector<2x32xf32>
    %46 = arith.mulf %41, %43 : vector<2x32xf32>
    %47 = arith.addf %45, %46 : vector<2x32xf32>
    %48 = math.tanh %47 : vector<2x32xf32>
    %49 = arith.mulf %44, %48 : vector<2x32xf32>
    %50 = vector.extract_strided_slice %49 {offsets = [1, 0], sizes = [1, 32], strides = [1, 1]} : vector<2x32xf32> to vector<1x32xf32>
    %51 = vector.extract_strided_slice %5 {offsets = [2, 0], sizes = [2, 128], strides = [1, 1]} : vector<16x128xf32> to vector<2x128xf32>
    %cst_19 = arith.constant dense<0.000000e+00> : vector<2x128xf32>
    %52 = tpu.matmul %30, %6, %cst_19 {dimension_numbers = #tpu.dot_dimension_numbers<[1], [0], [0], [1], [0, 0, 1, 1], [], []>} : vector<2x32xf32>, vector<32x128xf32>, vector<2x128xf32> -> vector<2x128xf32>
    %53 = arith.addf %51, %52 : vector<2x128xf32>
    %54 = arith.negf %53 : vector<2x128xf32>
    %55 = math.exp %54 : vector<2x128xf32>
    %cst_20 = arith.constant 1.000000e+00 : f32
    %56 = vector.broadcast %cst_20 : f32 to vector<2x128xf32>
    %57 = arith.addf %56, %55 : vector<2x128xf32>
    %58 = arith.divf %56, %57 : vector<2x128xf32>
    %59 = math.tanh %53 : vector<2x128xf32>
    %60 = vector.extract_strided_slice %58 {offsets = [0, 0], sizes = [2, 32], strides = [1, 1]} : vector<2x128xf32> to vector<2x32xf32>
    %61 = vector.extract_strided_slice %58 {offsets = [0, 32], sizes = [2, 32], strides = [1, 1]} : vector<2x128xf32> to vector<2x32xf32>
    %62 = vector.extract_strided_slice %59 {offsets = [0, 64], sizes = [2, 32], strides = [1, 1]} : vector<2x128xf32> to vector<2x32xf32>
    %63 = vector.extract_strided_slice %58 {offsets = [0, 96], sizes = [2, 32], strides = [1, 1]} : vector<2x128xf32> to vector<2x32xf32>
    %64 = arith.mulf %61, %28 : vector<2x32xf32>
    %65 = arith.mulf %60, %62 : vector<2x32xf32>
    %66 = arith.addf %64, %65 : vector<2x32xf32>
    %67 = math.tanh %66 : vector<2x32xf32>
    %68 = arith.mulf %63, %67 : vector<2x32xf32>
    %69 = tpu.concatenate %68, %49 in 1 : vector<2x32xf32>, vector<2x32xf32> -> vector<2x64xf32>
    %cst_21 = arith.constant dense<0.000000e+00> : vector<2x128xf32>
    %70 = tpu.matmul %69, %7, %cst_21 {dimension_numbers = #tpu.dot_dimension_numbers<[1], [0], [0], [1], [0, 0, 1, 1], [], []>} : vector<2x64xf32>, vector<64x128xf32>, vector<2x128xf32> -> vector<2x128xf32>
    %71 = vector.broadcast %8 : vector<1x128xf32> to vector<2x128xf32>
    %72 = arith.addf %70, %71 : vector<2x128xf32>
    %73 = arith.negf %72 : vector<2x128xf32>
    %74 = math.exp %73 : vector<2x128xf32>
    %cst_22 = arith.constant 1.000000e+00 : f32
    %75 = vector.broadcast %cst_22 : f32 to vector<2x128xf32>
    %76 = arith.addf %75, %74 : vector<2x128xf32>
    %77 = arith.divf %75, %76 : vector<2x128xf32>
    %78 = math.tanh %72 : vector<2x128xf32>
    %79 = vector.extract_strided_slice %77 {offsets = [0, 0], sizes = [2, 32], strides = [1, 1]} : vector<2x128xf32> to vector<2x32xf32>
    %80 = vector.extract_strided_slice %77 {offsets = [0, 32], sizes = [2, 32], strides = [1, 1]} : vector<2x128xf32> to vector<2x32xf32>
    %81 = vector.extract_strided_slice %78 {offsets = [0, 64], sizes = [2, 32], strides = [1, 1]} : vector<2x128xf32> to vector<2x32xf32>
    %82 = vector.extract_strided_slice %77 {offsets = [0, 96], sizes = [2, 32], strides = [1, 1]} : vector<2x128xf32> to vector<2x32xf32>
    %83 = arith.mulf %80, %47 : vector<2x32xf32>
    %84 = arith.mulf %79, %81 : vector<2x32xf32>
    %85 = arith.addf %83, %84 : vector<2x32xf32>
    %86 = math.tanh %85 : vector<2x32xf32>
    %87 = arith.mulf %82, %86 : vector<2x32xf32>
    %88 = vector.extract_strided_slice %87 {offsets = [1, 0], sizes = [1, 32], strides = [1, 1]} : vector<2x32xf32> to vector<1x32xf32>
    %89 = vector.extract_strided_slice %5 {offsets = [4, 0], sizes = [2, 128], strides = [1, 1]} : vector<16x128xf32> to vector<2x128xf32>
    %cst_23 = arith.constant dense<0.000000e+00> : vector<2x128xf32>
    %90 = tpu.matmul %68, %6, %cst_23 {dimension_numbers = #tpu.dot_dimension_numbers<[1], [0], [0], [1], [0, 0, 1, 1], [], []>} : vector<2x32xf32>, vector<32x128xf32>, vector<2x128xf32> -> vector<2x128xf32>
    %91 = arith.addf %89, %90 : vector<2x128xf32>
    %92 = arith.negf %91 : vector<2x128xf32>
    %93 = math.exp %92 : vector<2x128xf32>
    %cst_24 = arith.constant 1.000000e+00 : f32
    %94 = vector.broadcast %cst_24 : f32 to vector<2x128xf32>
    %95 = arith.addf %94, %93 : vector<2x128xf32>
    %96 = arith.divf %94, %95 : vector<2x128xf32>
    %97 = math.tanh %91 : vector<2x128xf32>
    %98 = vector.extract_strided_slice %96 {offsets = [0, 0], sizes = [2, 32], strides = [1, 1]} : vector<2x128xf32> to vector<2x32xf32>
    %99 = vector.extract_strided_slice %96 {offsets = [0, 32], sizes = [2, 32], strides = [1, 1]} : vector<2x128xf32> to vector<2x32xf32>
    %100 = vector.extract_strided_slice %97 {offsets = [0, 64], sizes = [2, 32], strides = [1, 1]} : vector<2x128xf32> to vector<2x32xf32>
    %101 = vector.extract_strided_slice %96 {offsets = [0, 96], sizes = [2, 32], strides = [1, 1]} : vector<2x128xf32> to vector<2x32xf32>
    %102 = arith.mulf %99, %66 : vector<2x32xf32>
    %103 = arith.mulf %98, %100 : vector<2x32xf32>
    %104 = arith.addf %102, %103 : vector<2x32xf32>
    %105 = math.tanh %104 : vector<2x32xf32>
    %106 = arith.mulf %101, %105 : vector<2x32xf32>
    %107 = tpu.concatenate %106, %87 in 1 : vector<2x32xf32>, vector<2x32xf32> -> vector<2x64xf32>
    %cst_25 = arith.constant dense<0.000000e+00> : vector<2x128xf32>
    %108 = tpu.matmul %107, %7, %cst_25 {dimension_numbers = #tpu.dot_dimension_numbers<[1], [0], [0], [1], [0, 0, 1, 1], [], []>} : vector<2x64xf32>, vector<64x128xf32>, vector<2x128xf32> -> vector<2x128xf32>
    %109 = vector.broadcast %8 : vector<1x128xf32> to vector<2x128xf32>
    %110 = arith.addf %108, %109 : vector<2x128xf32>
    %111 = arith.negf %110 : vector<2x128xf32>
    %112 = math.exp %111 : vector<2x128xf32>
    %cst_26 = arith.constant 1.000000e+00 : f32
    %113 = vector.broadcast %cst_26 : f32 to vector<2x128xf32>
    %114 = arith.addf %113, %112 : vector<2x128xf32>
    %115 = arith.divf %113, %114 : vector<2x128xf32>
    %116 = math.tanh %110 : vector<2x128xf32>
    %117 = vector.extract_strided_slice %115 {offsets = [0, 0], sizes = [2, 32], strides = [1, 1]} : vector<2x128xf32> to vector<2x32xf32>
    %118 = vector.extract_strided_slice %115 {offsets = [0, 32], sizes = [2, 32], strides = [1, 1]} : vector<2x128xf32> to vector<2x32xf32>
    %119 = vector.extract_strided_slice %116 {offsets = [0, 64], sizes = [2, 32], strides = [1, 1]} : vector<2x128xf32> to vector<2x32xf32>
    %120 = vector.extract_strided_slice %115 {offsets = [0, 96], sizes = [2, 32], strides = [1, 1]} : vector<2x128xf32> to vector<2x32xf32>
    %121 = arith.mulf %118, %85 : vector<2x32xf32>
    %122 = arith.mulf %117, %119 : vector<2x32xf32>
    %123 = arith.addf %121, %122 : vector<2x32xf32>
    %124 = math.tanh %123 : vector<2x32xf32>
    %125 = arith.mulf %120, %124 : vector<2x32xf32>
    %126 = vector.extract_strided_slice %125 {offsets = [1, 0], sizes = [1, 32], strides = [1, 1]} : vector<2x32xf32> to vector<1x32xf32>
    %127 = vector.extract_strided_slice %5 {offsets = [6, 0], sizes = [2, 128], strides = [1, 1]} : vector<16x128xf32> to vector<2x128xf32>
    %cst_27 = arith.constant dense<0.000000e+00> : vector<2x128xf32>
    %128 = tpu.matmul %106, %6, %cst_27 {dimension_numbers = #tpu.dot_dimension_numbers<[1], [0], [0], [1], [0, 0, 1, 1], [], []>} : vector<2x32xf32>, vector<32x128xf32>, vector<2x128xf32> -> vector<2x128xf32>
    %129 = arith.addf %127, %128 : vector<2x128xf32>
    %130 = arith.negf %129 : vector<2x128xf32>
    %131 = math.exp %130 : vector<2x128xf32>
    %cst_28 = arith.constant 1.000000e+00 : f32
    %132 = vector.broadcast %cst_28 : f32 to vector<2x128xf32>
    %133 = arith.addf %132, %131 : vector<2x128xf32>
    %134 = arith.divf %132, %133 : vector<2x128xf32>
    %135 = math.tanh %129 : vector<2x128xf32>
    %136 = vector.extract_strided_slice %134 {offsets = [0, 0], sizes = [2, 32], strides = [1, 1]} : vector<2x128xf32> to vector<2x32xf32>
    %137 = vector.extract_strided_slice %134 {offsets = [0, 32], sizes = [2, 32], strides = [1, 1]} : vector<2x128xf32> to vector<2x32xf32>
    %138 = vector.extract_strided_slice %135 {offsets = [0, 64], sizes = [2, 32], strides = [1, 1]} : vector<2x128xf32> to vector<2x32xf32>
    %139 = vector.extract_strided_slice %134 {offsets = [0, 96], sizes = [2, 32], strides = [1, 1]} : vector<2x128xf32> to vector<2x32xf32>
    %140 = arith.mulf %137, %104 : vector<2x32xf32>
    %141 = arith.mulf %136, %138 : vector<2x32xf32>
    %142 = arith.addf %140, %141 : vector<2x32xf32>
    %143 = math.tanh %142 : vector<2x32xf32>
    %144 = arith.mulf %139, %143 : vector<2x32xf32>
    %145 = tpu.concatenate %144, %125 in 1 : vector<2x32xf32>, vector<2x32xf32> -> vector<2x64xf32>
    %cst_29 = arith.constant dense<0.000000e+00> : vector<2x128xf32>
    %146 = tpu.matmul %145, %7, %cst_29 {dimension_numbers = #tpu.dot_dimension_numbers<[1], [0], [0], [1], [0, 0, 1, 1], [], []>} : vector<2x64xf32>, vector<64x128xf32>, vector<2x128xf32> -> vector<2x128xf32>
    %147 = vector.broadcast %8 : vector<1x128xf32> to vector<2x128xf32>
    %148 = arith.addf %146, %147 : vector<2x128xf32>
    %149 = arith.negf %148 : vector<2x128xf32>
    %150 = math.exp %149 : vector<2x128xf32>
    %cst_30 = arith.constant 1.000000e+00 : f32
    %151 = vector.broadcast %cst_30 : f32 to vector<2x128xf32>
    %152 = arith.addf %151, %150 : vector<2x128xf32>
    %153 = arith.divf %151, %152 : vector<2x128xf32>
    %154 = math.tanh %148 : vector<2x128xf32>
    %155 = vector.extract_strided_slice %153 {offsets = [0, 0], sizes = [2, 32], strides = [1, 1]} : vector<2x128xf32> to vector<2x32xf32>
    %156 = vector.extract_strided_slice %153 {offsets = [0, 32], sizes = [2, 32], strides = [1, 1]} : vector<2x128xf32> to vector<2x32xf32>
    %157 = vector.extract_strided_slice %154 {offsets = [0, 64], sizes = [2, 32], strides = [1, 1]} : vector<2x128xf32> to vector<2x32xf32>
    %158 = vector.extract_strided_slice %153 {offsets = [0, 96], sizes = [2, 32], strides = [1, 1]} : vector<2x128xf32> to vector<2x32xf32>
    %159 = arith.mulf %156, %123 : vector<2x32xf32>
    %160 = arith.mulf %155, %157 : vector<2x32xf32>
    %161 = arith.addf %159, %160 : vector<2x32xf32>
    %162 = math.tanh %161 : vector<2x32xf32>
    %163 = arith.mulf %158, %162 : vector<2x32xf32>
    %164 = vector.extract_strided_slice %163 {offsets = [1, 0], sizes = [1, 32], strides = [1, 1]} : vector<2x32xf32> to vector<1x32xf32>
    %165 = vector.extract_strided_slice %5 {offsets = [8, 0], sizes = [2, 128], strides = [1, 1]} : vector<16x128xf32> to vector<2x128xf32>
    %cst_31 = arith.constant dense<0.000000e+00> : vector<2x128xf32>
    %166 = tpu.matmul %144, %6, %cst_31 {dimension_numbers = #tpu.dot_dimension_numbers<[1], [0], [0], [1], [0, 0, 1, 1], [], []>} : vector<2x32xf32>, vector<32x128xf32>, vector<2x128xf32> -> vector<2x128xf32>
    %167 = arith.addf %165, %166 : vector<2x128xf32>
    %168 = arith.negf %167 : vector<2x128xf32>
    %169 = math.exp %168 : vector<2x128xf32>
    %cst_32 = arith.constant 1.000000e+00 : f32
    %170 = vector.broadcast %cst_32 : f32 to vector<2x128xf32>
    %171 = arith.addf %170, %169 : vector<2x128xf32>
    %172 = arith.divf %170, %171 : vector<2x128xf32>
    %173 = math.tanh %167 : vector<2x128xf32>
    %174 = vector.extract_strided_slice %172 {offsets = [0, 0], sizes = [2, 32], strides = [1, 1]} : vector<2x128xf32> to vector<2x32xf32>
    %175 = vector.extract_strided_slice %172 {offsets = [0, 32], sizes = [2, 32], strides = [1, 1]} : vector<2x128xf32> to vector<2x32xf32>
    %176 = vector.extract_strided_slice %173 {offsets = [0, 64], sizes = [2, 32], strides = [1, 1]} : vector<2x128xf32> to vector<2x32xf32>
    %177 = vector.extract_strided_slice %172 {offsets = [0, 96], sizes = [2, 32], strides = [1, 1]} : vector<2x128xf32> to vector<2x32xf32>
    %178 = arith.mulf %175, %142 : vector<2x32xf32>
    %179 = arith.mulf %174, %176 : vector<2x32xf32>
    %180 = arith.addf %178, %179 : vector<2x32xf32>
    %181 = math.tanh %180 : vector<2x32xf32>
    %182 = arith.mulf %177, %181 : vector<2x32xf32>
    %183 = tpu.concatenate %182, %163 in 1 : vector<2x32xf32>, vector<2x32xf32> -> vector<2x64xf32>
    %cst_33 = arith.constant dense<0.000000e+00> : vector<2x128xf32>
    %184 = tpu.matmul %183, %7, %cst_33 {dimension_numbers = #tpu.dot_dimension_numbers<[1], [0], [0], [1], [0, 0, 1, 1], [], []>} : vector<2x64xf32>, vector<64x128xf32>, vector<2x128xf32> -> vector<2x128xf32>
    %185 = vector.broadcast %8 : vector<1x128xf32> to vector<2x128xf32>
    %186 = arith.addf %184, %185 : vector<2x128xf32>
    %187 = arith.negf %186 : vector<2x128xf32>
    %188 = math.exp %187 : vector<2x128xf32>
    %cst_34 = arith.constant 1.000000e+00 : f32
    %189 = vector.broadcast %cst_34 : f32 to vector<2x128xf32>
    %190 = arith.addf %189, %188 : vector<2x128xf32>
    %191 = arith.divf %189, %190 : vector<2x128xf32>
    %192 = math.tanh %186 : vector<2x128xf32>
    %193 = vector.extract_strided_slice %191 {offsets = [0, 0], sizes = [2, 32], strides = [1, 1]} : vector<2x128xf32> to vector<2x32xf32>
    %194 = vector.extract_strided_slice %191 {offsets = [0, 32], sizes = [2, 32], strides = [1, 1]} : vector<2x128xf32> to vector<2x32xf32>
    %195 = vector.extract_strided_slice %192 {offsets = [0, 64], sizes = [2, 32], strides = [1, 1]} : vector<2x128xf32> to vector<2x32xf32>
    %196 = vector.extract_strided_slice %191 {offsets = [0, 96], sizes = [2, 32], strides = [1, 1]} : vector<2x128xf32> to vector<2x32xf32>
    %197 = arith.mulf %194, %161 : vector<2x32xf32>
    %198 = arith.mulf %193, %195 : vector<2x32xf32>
    %199 = arith.addf %197, %198 : vector<2x32xf32>
    %200 = math.tanh %199 : vector<2x32xf32>
    %201 = arith.mulf %196, %200 : vector<2x32xf32>
    %202 = vector.extract_strided_slice %201 {offsets = [1, 0], sizes = [1, 32], strides = [1, 1]} : vector<2x32xf32> to vector<1x32xf32>
    %203 = vector.extract_strided_slice %5 {offsets = [10, 0], sizes = [2, 128], strides = [1, 1]} : vector<16x128xf32> to vector<2x128xf32>
    %cst_35 = arith.constant dense<0.000000e+00> : vector<2x128xf32>
    %204 = tpu.matmul %182, %6, %cst_35 {dimension_numbers = #tpu.dot_dimension_numbers<[1], [0], [0], [1], [0, 0, 1, 1], [], []>} : vector<2x32xf32>, vector<32x128xf32>, vector<2x128xf32> -> vector<2x128xf32>
    %205 = arith.addf %203, %204 : vector<2x128xf32>
    %206 = arith.negf %205 : vector<2x128xf32>
    %207 = math.exp %206 : vector<2x128xf32>
    %cst_36 = arith.constant 1.000000e+00 : f32
    %208 = vector.broadcast %cst_36 : f32 to vector<2x128xf32>
    %209 = arith.addf %208, %207 : vector<2x128xf32>
    %210 = arith.divf %208, %209 : vector<2x128xf32>
    %211 = math.tanh %205 : vector<2x128xf32>
    %212 = vector.extract_strided_slice %210 {offsets = [0, 0], sizes = [2, 32], strides = [1, 1]} : vector<2x128xf32> to vector<2x32xf32>
    %213 = vector.extract_strided_slice %210 {offsets = [0, 32], sizes = [2, 32], strides = [1, 1]} : vector<2x128xf32> to vector<2x32xf32>
    %214 = vector.extract_strided_slice %211 {offsets = [0, 64], sizes = [2, 32], strides = [1, 1]} : vector<2x128xf32> to vector<2x32xf32>
    %215 = vector.extract_strided_slice %210 {offsets = [0, 96], sizes = [2, 32], strides = [1, 1]} : vector<2x128xf32> to vector<2x32xf32>
    %216 = arith.mulf %213, %180 : vector<2x32xf32>
    %217 = arith.mulf %212, %214 : vector<2x32xf32>
    %218 = arith.addf %216, %217 : vector<2x32xf32>
    %219 = math.tanh %218 : vector<2x32xf32>
    %220 = arith.mulf %215, %219 : vector<2x32xf32>
    %221 = tpu.concatenate %220, %201 in 1 : vector<2x32xf32>, vector<2x32xf32> -> vector<2x64xf32>
    %cst_37 = arith.constant dense<0.000000e+00> : vector<2x128xf32>
    %222 = tpu.matmul %221, %7, %cst_37 {dimension_numbers = #tpu.dot_dimension_numbers<[1], [0], [0], [1], [0, 0, 1, 1], [], []>} : vector<2x64xf32>, vector<64x128xf32>, vector<2x128xf32> -> vector<2x128xf32>
    %223 = vector.broadcast %8 : vector<1x128xf32> to vector<2x128xf32>
    %224 = arith.addf %222, %223 : vector<2x128xf32>
    %225 = arith.negf %224 : vector<2x128xf32>
    %226 = math.exp %225 : vector<2x128xf32>
    %cst_38 = arith.constant 1.000000e+00 : f32
    %227 = vector.broadcast %cst_38 : f32 to vector<2x128xf32>
    %228 = arith.addf %227, %226 : vector<2x128xf32>
    %229 = arith.divf %227, %228 : vector<2x128xf32>
    %230 = math.tanh %224 : vector<2x128xf32>
    %231 = vector.extract_strided_slice %229 {offsets = [0, 0], sizes = [2, 32], strides = [1, 1]} : vector<2x128xf32> to vector<2x32xf32>
    %232 = vector.extract_strided_slice %229 {offsets = [0, 32], sizes = [2, 32], strides = [1, 1]} : vector<2x128xf32> to vector<2x32xf32>
    %233 = vector.extract_strided_slice %230 {offsets = [0, 64], sizes = [2, 32], strides = [1, 1]} : vector<2x128xf32> to vector<2x32xf32>
    %234 = vector.extract_strided_slice %229 {offsets = [0, 96], sizes = [2, 32], strides = [1, 1]} : vector<2x128xf32> to vector<2x32xf32>
    %235 = arith.mulf %232, %199 : vector<2x32xf32>
    %236 = arith.mulf %231, %233 : vector<2x32xf32>
    %237 = arith.addf %235, %236 : vector<2x32xf32>
    %238 = math.tanh %237 : vector<2x32xf32>
    %239 = arith.mulf %234, %238 : vector<2x32xf32>
    %240 = vector.extract_strided_slice %239 {offsets = [1, 0], sizes = [1, 32], strides = [1, 1]} : vector<2x32xf32> to vector<1x32xf32>
    %241 = vector.extract_strided_slice %5 {offsets = [12, 0], sizes = [2, 128], strides = [1, 1]} : vector<16x128xf32> to vector<2x128xf32>
    %cst_39 = arith.constant dense<0.000000e+00> : vector<2x128xf32>
    %242 = tpu.matmul %220, %6, %cst_39 {dimension_numbers = #tpu.dot_dimension_numbers<[1], [0], [0], [1], [0, 0, 1, 1], [], []>} : vector<2x32xf32>, vector<32x128xf32>, vector<2x128xf32> -> vector<2x128xf32>
    %243 = arith.addf %241, %242 : vector<2x128xf32>
    %244 = arith.negf %243 : vector<2x128xf32>
    %245 = math.exp %244 : vector<2x128xf32>
    %cst_40 = arith.constant 1.000000e+00 : f32
    %246 = vector.broadcast %cst_40 : f32 to vector<2x128xf32>
    %247 = arith.addf %246, %245 : vector<2x128xf32>
    %248 = arith.divf %246, %247 : vector<2x128xf32>
    %249 = math.tanh %243 : vector<2x128xf32>
    %250 = vector.extract_strided_slice %248 {offsets = [0, 0], sizes = [2, 32], strides = [1, 1]} : vector<2x128xf32> to vector<2x32xf32>
    %251 = vector.extract_strided_slice %248 {offsets = [0, 32], sizes = [2, 32], strides = [1, 1]} : vector<2x128xf32> to vector<2x32xf32>
    %252 = vector.extract_strided_slice %249 {offsets = [0, 64], sizes = [2, 32], strides = [1, 1]} : vector<2x128xf32> to vector<2x32xf32>
    %253 = vector.extract_strided_slice %248 {offsets = [0, 96], sizes = [2, 32], strides = [1, 1]} : vector<2x128xf32> to vector<2x32xf32>
    %254 = arith.mulf %251, %218 : vector<2x32xf32>
    %255 = arith.mulf %250, %252 : vector<2x32xf32>
    %256 = arith.addf %254, %255 : vector<2x32xf32>
    %257 = math.tanh %256 : vector<2x32xf32>
    %258 = arith.mulf %253, %257 : vector<2x32xf32>
    %259 = tpu.concatenate %258, %239 in 1 : vector<2x32xf32>, vector<2x32xf32> -> vector<2x64xf32>
    %cst_41 = arith.constant dense<0.000000e+00> : vector<2x128xf32>
    %260 = tpu.matmul %259, %7, %cst_41 {dimension_numbers = #tpu.dot_dimension_numbers<[1], [0], [0], [1], [0, 0, 1, 1], [], []>} : vector<2x64xf32>, vector<64x128xf32>, vector<2x128xf32> -> vector<2x128xf32>
    %261 = vector.broadcast %8 : vector<1x128xf32> to vector<2x128xf32>
    %262 = arith.addf %260, %261 : vector<2x128xf32>
    %263 = arith.negf %262 : vector<2x128xf32>
    %264 = math.exp %263 : vector<2x128xf32>
    %cst_42 = arith.constant 1.000000e+00 : f32
    %265 = vector.broadcast %cst_42 : f32 to vector<2x128xf32>
    %266 = arith.addf %265, %264 : vector<2x128xf32>
    %267 = arith.divf %265, %266 : vector<2x128xf32>
    %268 = math.tanh %262 : vector<2x128xf32>
    %269 = vector.extract_strided_slice %267 {offsets = [0, 0], sizes = [2, 32], strides = [1, 1]} : vector<2x128xf32> to vector<2x32xf32>
    %270 = vector.extract_strided_slice %267 {offsets = [0, 32], sizes = [2, 32], strides = [1, 1]} : vector<2x128xf32> to vector<2x32xf32>
    %271 = vector.extract_strided_slice %268 {offsets = [0, 64], sizes = [2, 32], strides = [1, 1]} : vector<2x128xf32> to vector<2x32xf32>
    %272 = vector.extract_strided_slice %267 {offsets = [0, 96], sizes = [2, 32], strides = [1, 1]} : vector<2x128xf32> to vector<2x32xf32>
    %273 = arith.mulf %270, %237 : vector<2x32xf32>
    %274 = arith.mulf %269, %271 : vector<2x32xf32>
    %275 = arith.addf %273, %274 : vector<2x32xf32>
    %276 = math.tanh %275 : vector<2x32xf32>
    %277 = arith.mulf %272, %276 : vector<2x32xf32>
    %278 = vector.extract_strided_slice %277 {offsets = [1, 0], sizes = [1, 32], strides = [1, 1]} : vector<2x32xf32> to vector<1x32xf32>
    %279 = vector.extract_strided_slice %5 {offsets = [14, 0], sizes = [2, 128], strides = [1, 1]} : vector<16x128xf32> to vector<2x128xf32>
    %cst_43 = arith.constant dense<0.000000e+00> : vector<2x128xf32>
    %280 = tpu.matmul %258, %6, %cst_43 {dimension_numbers = #tpu.dot_dimension_numbers<[1], [0], [0], [1], [0, 0, 1, 1], [], []>} : vector<2x32xf32>, vector<32x128xf32>, vector<2x128xf32> -> vector<2x128xf32>
    %281 = arith.addf %279, %280 : vector<2x128xf32>
    %282 = arith.negf %281 : vector<2x128xf32>
    %283 = math.exp %282 : vector<2x128xf32>
    %cst_44 = arith.constant 1.000000e+00 : f32
    %284 = vector.broadcast %cst_44 : f32 to vector<2x128xf32>
    %285 = arith.addf %284, %283 : vector<2x128xf32>
    %286 = arith.divf %284, %285 : vector<2x128xf32>
    %287 = math.tanh %281 : vector<2x128xf32>
    %288 = vector.extract_strided_slice %286 {offsets = [0, 0], sizes = [2, 32], strides = [1, 1]} : vector<2x128xf32> to vector<2x32xf32>
    %289 = vector.extract_strided_slice %286 {offsets = [0, 32], sizes = [2, 32], strides = [1, 1]} : vector<2x128xf32> to vector<2x32xf32>
    %290 = vector.extract_strided_slice %287 {offsets = [0, 64], sizes = [2, 32], strides = [1, 1]} : vector<2x128xf32> to vector<2x32xf32>
    %291 = vector.extract_strided_slice %286 {offsets = [0, 96], sizes = [2, 32], strides = [1, 1]} : vector<2x128xf32> to vector<2x32xf32>
    %292 = arith.mulf %289, %256 : vector<2x32xf32>
    %293 = arith.mulf %288, %290 : vector<2x32xf32>
    %294 = arith.addf %292, %293 : vector<2x32xf32>
    %295 = math.tanh %294 : vector<2x32xf32>
    %296 = arith.mulf %291, %295 : vector<2x32xf32>
    %297 = tpu.concatenate %296, %277 in 1 : vector<2x32xf32>, vector<2x32xf32> -> vector<2x64xf32>
    %cst_45 = arith.constant dense<0.000000e+00> : vector<2x128xf32>
    %298 = tpu.matmul %297, %7, %cst_45 {dimension_numbers = #tpu.dot_dimension_numbers<[1], [0], [0], [1], [0, 0, 1, 1], [], []>} : vector<2x64xf32>, vector<64x128xf32>, vector<2x128xf32> -> vector<2x128xf32>
    %299 = vector.broadcast %8 : vector<1x128xf32> to vector<2x128xf32>
    %300 = arith.addf %298, %299 : vector<2x128xf32>
    %301 = arith.negf %300 : vector<2x128xf32>
    %302 = math.exp %301 : vector<2x128xf32>
    %cst_46 = arith.constant 1.000000e+00 : f32
    %303 = vector.broadcast %cst_46 : f32 to vector<2x128xf32>
    %304 = arith.addf %303, %302 : vector<2x128xf32>
    %305 = arith.divf %303, %304 : vector<2x128xf32>
    %306 = math.tanh %300 : vector<2x128xf32>
    %307 = vector.extract_strided_slice %305 {offsets = [0, 0], sizes = [2, 32], strides = [1, 1]} : vector<2x128xf32> to vector<2x32xf32>
    %308 = vector.extract_strided_slice %305 {offsets = [0, 32], sizes = [2, 32], strides = [1, 1]} : vector<2x128xf32> to vector<2x32xf32>
    %309 = vector.extract_strided_slice %306 {offsets = [0, 64], sizes = [2, 32], strides = [1, 1]} : vector<2x128xf32> to vector<2x32xf32>
    %310 = vector.extract_strided_slice %305 {offsets = [0, 96], sizes = [2, 32], strides = [1, 1]} : vector<2x128xf32> to vector<2x32xf32>
    %311 = arith.mulf %308, %275 : vector<2x32xf32>
    %312 = arith.mulf %307, %309 : vector<2x32xf32>
    %313 = arith.addf %311, %312 : vector<2x32xf32>
    %314 = math.tanh %313 : vector<2x32xf32>
    %315 = arith.mulf %310, %314 : vector<2x32xf32>
    %316 = vector.extract_strided_slice %315 {offsets = [1, 0], sizes = [1, 32], strides = [1, 1]} : vector<2x32xf32> to vector<1x32xf32>
    %317 = tpu.concatenate %50, %88, %126, %164, %202, %240, %278, %316 in 0 : vector<1x32xf32>, vector<1x32xf32>, vector<1x32xf32>, vector<1x32xf32>, vector<1x32xf32>, vector<1x32xf32>, vector<1x32xf32>, vector<1x32xf32> -> vector<8x32xf32>
    %c0_47 = arith.constant 0 : index
    %c0_48 = arith.constant 0 : index
    %318 = vector.load %arg6[%c0_47, %c0_48] : memref<32x50xf32, #tpu.memory_space<vmem>>, vector<32x50xf32>
    %cst_49 = arith.constant dense<0.000000e+00> : vector<8x50xf32>
    %319 = tpu.matmul %317, %318, %cst_49 {dimension_numbers = #tpu.dot_dimension_numbers<[1], [0], [0], [1], [0, 0, 1, 1], [], []>} : vector<8x32xf32>, vector<32x50xf32>, vector<8x50xf32> -> vector<8x50xf32>
    %c0_50 = arith.constant 0 : index
    %c0_51 = arith.constant 0 : index
    %320 = vector.load %arg7[%c0_50, %c0_51] : memref<1x50xf32, #tpu.memory_space<vmem>>, vector<1x50xf32>
    %321 = vector.broadcast %320 : vector<1x50xf32> to vector<8x50xf32>
    %322 = arith.addf %319, %321 : vector<8x50xf32>
    %c0_52 = arith.constant 0 : index
    %c0_53 = arith.constant 0 : index
    %323 = vector.load %arg8[%c0_52, %c0_53] : memref<50x256xf32, #tpu.memory_space<vmem>>, vector<50x256xf32>
    %cst_54 = arith.constant dense<0.000000e+00> : vector<8x256xf32>
    %324 = tpu.matmul %322, %323, %cst_54 {dimension_numbers = #tpu.dot_dimension_numbers<[1], [0], [0], [1], [0, 0, 1, 1], [], []>} : vector<8x50xf32>, vector<50x256xf32>, vector<8x256xf32> -> vector<8x256xf32>
    %c0_55 = arith.constant 0 : index
    %c0_56 = arith.constant 0 : index
    %325 = vector.load %arg9[%c0_55, %c0_56] : memref<1x256xf32, #tpu.memory_space<vmem>>, vector<1x256xf32>
    %326 = vector.broadcast %325 : vector<1x256xf32> to vector<8x256xf32>
    %327 = arith.addf %324, %326 : vector<8x256xf32>
    %cst_57 = arith.constant 0.000000e+00 : f32
    %328 = vector.broadcast %cst_57 : f32 to vector<8x256xf32>
    %329 = arith.maximumf %327, %328 : vector<8x256xf32>
    %330 = vector.extract_strided_slice %329 {offsets = [0, 0], sizes = [8, 128], strides = [1, 1]} : vector<8x256xf32> to vector<8x128xf32>
    %331 = vector.extract_strided_slice %329 {offsets = [0, 128], sizes = [8, 128], strides = [1, 1]} : vector<8x256xf32> to vector<8x128xf32>
    %c0_58 = arith.constant 0 : index
    %c0_59 = arith.constant 0 : index
    %332 = vector.load %arg10[%c0_58, %c0_59] : memref<128x128xf32, #tpu.memory_space<vmem>>, vector<128x128xf32>
    %cst_60 = arith.constant dense<0.000000e+00> : vector<8x128xf32>
    %333 = tpu.matmul %330, %332, %cst_60 {dimension_numbers = #tpu.dot_dimension_numbers<[1], [0], [0], [1], [0, 0, 1, 1], [], []>} : vector<8x128xf32>, vector<128x128xf32>, vector<8x128xf32> -> vector<8x128xf32>
    %c0_61 = arith.constant 0 : index
    %c0_62 = arith.constant 0 : index
    %334 = vector.load %arg11[%c0_61, %c0_62] : memref<1x128xf32, #tpu.memory_space<vmem>>, vector<1x128xf32>
    %335 = vector.broadcast %334 : vector<1x128xf32> to vector<8x128xf32>
    %336 = arith.addf %333, %335 : vector<8x128xf32>
    %cst_63 = arith.constant 0.000000e+00 : f32
    %337 = vector.broadcast %cst_63 : f32 to vector<8x128xf32>
    %338 = arith.maximumf %336, %337 : vector<8x128xf32>
    %c0_64 = arith.constant 0 : index
    %c0_65 = arith.constant 0 : index
    %339 = vector.load %arg12[%c0_64, %c0_65] : memref<128x1xf32, #tpu.memory_space<vmem>>, vector<128x1xf32>
    %cst_66 = arith.constant dense<0.000000e+00> : vector<8x1xf32>
    %340 = tpu.matmul %338, %339, %cst_66 {dimension_numbers = #tpu.dot_dimension_numbers<[1], [0], [0], [1], [0, 0, 1, 1], [], []>} : vector<8x128xf32>, vector<128x1xf32>, vector<8x1xf32> -> vector<8x1xf32>
    %c0_67 = arith.constant 0 : index
    %c0_68 = arith.constant 0 : index
    %341 = vector.load %arg13[%c0_67, %c0_68] : memref<1x1xf32, #tpu.memory_space<vmem>>, vector<1x1xf32>
    %342 = vector.broadcast %341 : vector<1x1xf32> to vector<8x1xf32>
    %343 = arith.addf %340, %342 : vector<8x1xf32>
    %c0_69 = arith.constant 0 : index
    %c0_70 = arith.constant 0 : index
    %344 = vector.load %arg14[%c0_69, %c0_70] : memref<128x2xf32, #tpu.memory_space<vmem>>, vector<128x2xf32>
    %cst_71 = arith.constant dense<0.000000e+00> : vector<8x2xf32>
    %345 = tpu.matmul %331, %344, %cst_71 {dimension_numbers = #tpu.dot_dimension_numbers<[1], [0], [0], [1], [0, 0, 1, 1], [], []>} : vector<8x128xf32>, vector<128x2xf32>, vector<8x2xf32> -> vector<8x2xf32>
    %c0_72 = arith.constant 0 : index
    %c0_73 = arith.constant 0 : index
    %346 = vector.load %arg15[%c0_72, %c0_73] : memref<1x2xf32, #tpu.memory_space<vmem>>, vector<1x2xf32>
    %347 = vector.broadcast %346 : vector<1x2xf32> to vector<8x2xf32>
    %348 = arith.addf %345, %347 : vector<8x2xf32>
    %cst_74 = arith.constant dense<0xFF800000> : vector<2xf32>
    %349 = vector.multi_reduction <maximumf>, %348, %cst_74 [0] : vector<8x2xf32> to vector<2xf32>
    %350 = vector.shape_cast %349 : vector<2xf32> to vector<1x2xf32>
    %351 = vector.broadcast %350 : vector<1x2xf32> to vector<8x2xf32>
    %352 = arith.subf %348, %351 : vector<8x2xf32>
    %353 = math.exp %352 : vector<8x2xf32>
    %cst_75 = arith.constant dense<0.000000e+00> : vector<2xf32>
    %354 = vector.multi_reduction <add>, %353, %cst_75 [0] : vector<8x2xf32> to vector<2xf32>
    %355 = vector.shape_cast %354 : vector<2xf32> to vector<1x2xf32>
    %356 = math.log %355 : vector<1x2xf32>
    %357 = arith.addf %356, %350 : vector<1x2xf32>
    %358 = vector.broadcast %357 : vector<1x2xf32> to vector<8x2xf32>
    %359 = arith.subf %348, %358 : vector<8x2xf32>
    %cst_76 = arith.constant 0.000000e+00 : f32
    %360 = vector.broadcast %cst_76 : f32 to vector<8x128xf32>
    %c0_77 = arith.constant 0 : index
    %c0_78 = arith.constant 0 : index
    %361 = vector.load %arg16[%c0_77, %c0_78] : memref<8x128xf32, #tpu.memory_space<vmem>>, vector<8x128xf32>
    tpu.vector_store %arg16[%c0_77, %c0_78], %360 {strides = array<i32>} : memref<8x128xf32, #tpu.memory_space<vmem>>, vector<8x128xf32>,
    %c0_79 = arith.constant 0 : index
    %c0_80 = arith.constant 0 : index
    %362 = vector.load %arg16[%c0_79, %c0_80] : memref<8x128xf32, #tpu.memory_space<vmem>>, vector<8x1xf32>
    tpu.vector_store %arg16[%c0_79, %c0_80], %343 {strides = array<i32>} : memref<8x128xf32, #tpu.memory_space<vmem>>, vector<8x1xf32>,
    %c0_81 = arith.constant 0 : index
    %c1 = arith.constant 1 : index
    %363 = vector.load %arg16[%c0_81, %c1] : memref<8x128xf32, #tpu.memory_space<vmem>>, vector<8x2xf32>
    tpu.vector_store %arg16[%c0_81, %c1], %359 {strides = array<i32>} : memref<8x128xf32, #tpu.memory_space<vmem>>, vector<8x2xf32>,
    return
  }
}

</mosaic_0001>

<llo_original>
// kernel: tpu_custom_call.1
$region0: #{tpu_custom_call.1}
  #allocation0 [shape = 'u32[]', space=smem, size = 0x4, offset = 0x4, fixed_abs, tag = 'smem constant byte address 0x4 - core index']
  #allocation1 [shape = 'u32[72,128]{1,0:T(1,128)}', space=vmem, size = 0x9000, scoped, tag = 'internal scratch']
  #allocation2 [shape = 'f32[1,1]{1,0:T(1,128)S(1)}', space=vmem, size = 0x200, scoped, tag = 'scoped memory for tpu_custom_call.1']
  %s0 = inlined_call_operand.vmem [shape: f32[16,4], index: 0, kind: input, shape index: {}]
  %s1 = inlined_call_operand.vmem [shape: f32[4,128], index: 1, kind: input, shape index: {}]
  %s2 = inlined_call_operand.vmem [shape: f32[32,128], index: 2, kind: input, shape index: {}]
  %s3 = inlined_call_operand.hbm [shape: f32[1,128], index: 3, kind: input, shape index: {}]
  %s4 = inlined_call_operand.hbm [shape: f32[64,128], index: 4, kind: input, shape index: {}]
  %s5 = inlined_call_operand.vmem [shape: f32[1,128], index: 5, kind: input, shape index: {}]
  %s6 = inlined_call_operand.hbm [shape: f32[32,50], index: 6, kind: input, shape index: {}]
  %s7 = inlined_call_operand.vmem [shape: f32[1,50], index: 7, kind: input, shape index: {}]
  %s8 = inlined_call_operand.vmem [shape: f32[50,256], index: 8, kind: input, shape index: {}]
  %s9 = inlined_call_operand.vmem [shape: f32[1,256], index: 9, kind: input, shape index: {}]
  %s10 = inlined_call_operand.vmem [shape: f32[128,128], index: 10, kind: input, shape index: {}]
  %s11 = inlined_call_operand.vmem [shape: f32[1,128], index: 11, kind: input, shape index: {}]
  %s12 = inlined_call_operand.vmem [shape: f32[128,1], index: 12, kind: input, shape index: {}]
  %s13 = inlined_call_operand.<no memory space> [shape: f32[1,1], index: 13, kind: input, shape index: {}]
  %s14 = inlined_call_operand.vmem [shape: f32[128,2], index: 14, kind: input, shape index: {}]
  %s15 = inlined_call_operand.vmem [shape: f32[1,2], index: 15, kind: input, shape index: {}]
  %s16 = inlined_call_operand.hbm [shape: f32[8,128], index: 16, kind: output, shape index: {}]
  %s17 = sld [smem:[#allocation0]]
  $region86: #{tpu_custom_call.1} parent=0
    _
  %s19 = ssub.s32 1, %s17
  %s20 = scalar_select 0, %s19, %s17
  %v21 = vstv %s13
  %22 = vst [vmem:[#allocation2] sm:$0x1] %v21
  $region1: #{tpu_custom_call.1} parent=0
    #allocation3 [shape = 'u8[512]{0}', space=vmem, size = 0x400, scoped, tag = 'input window, operand 3, single buffered']
    #allocation4 [shape = 's32[1]{0}', space=sflag, size = 0x4, scoped, tag = 'scoped memory for tpu_custom_call.1']
    #allocation5 [shape = 's32[1]{0}', space=sflag, size = 0x4, scoped, tag = 'scoped memory for tpu_custom_call.1']
    #allocation6 [shape = 'u8[32768]{0}', space=vmem, size = 0x8000, scoped, tag = 'input window, operand 4, single buffered']
    #allocation7 [shape = 's32[1]{0}', space=sflag, size = 0x4, scoped, tag = 'scoped memory for tpu_custom_call.1']
    #allocation8 [shape = 'u8[16384]{0}', space=vmem, size = 0x4000, scoped, tag = 'input window, operand 6, single buffered']
    #allocation9 [shape = 'u8[4096]{0}', space=vmem, size = 0x1000, scoped, tag = 'output window, operand 0, single buffered']
    %23 = vsyncpa [#allocation4], 0
    %24 = vsyncpa [#allocation7], 0
    %25 = vsyncpa [#allocation5], 0
    // Predicated region
    $region2: #{tpu_custom_call.1} parent=1 // pred_check
      _
    $region3: #{tpu_custom_call.1} parent=1 // pred_check_branch
      %27 = sbr.rel (0) target = $region5
    $region4: #{tpu_custom_call.1} parent=1 // pred_region
      _
    $region5: #{tpu_custom_call.1} parent=1 // pred_fallthru
      _
    // Predicated region
    $region6: #{tpu_custom_call.1} parent=1 // pred_check
      _
    $region7: #{tpu_custom_call.1} parent=1 // pred_check_branch
      %29 = sbr.rel (0) target = $region9
    $region8: #{tpu_custom_call.1} parent=1 // pred_region
      _
    $region9: #{tpu_custom_call.1} parent=1 // pred_fallthru
      _
    // Predicated region
    $region10: #{tpu_custom_call.1} parent=1 // pred_check
      _
    $region11: #{tpu_custom_call.1} parent=1 // pred_check_branch
      %31 = sbr.rel (0) target = $region13
    $region12: #{tpu_custom_call.1} parent=1 // pred_region
      _
    $region13: #{tpu_custom_call.1} parent=1 // pred_fallthru
      _
    // Predicated region
    $region14: #{tpu_custom_call.1} parent=1 // pred_check
      _
    $region15: #{tpu_custom_call.1} parent=1 // pred_check_branch
      %33 = sbr.rel (0) target = $region17
    $region16: #{tpu_custom_call.1} parent=1 // pred_region
      %35 = vsyncadd [#allocation4], 0
      %s37 = sshll.u32 %s3, 4
      %s38 = int_to_ptr.hbm [resolvable:$true] %s37
      %s39 = sshll.u32 [#allocation3], 4
      %s40 = int_to_ptr.vmem [resolvable:$true] %s39
      %42 = dma.hbm_to_vmem [thread:$0]  %s38, 16, %s40, [#allocation4]
    $region17: #{tpu_custom_call.1} parent=1 // pred_fallthru
      _
    // Predicated region
    $region18: #{tpu_custom_call.1} parent=1 // pred_check
      _
    $region19: #{tpu_custom_call.1} parent=1 // pred_check_branch
      %44 = sbr.rel (0) target = $region21
    $region20: #{tpu_custom_call.1} parent=1 // pred_region
      %46 = vsyncadd [#allocation7], 0
      %s47 = sshll.u32 %s4, 4
      %s48 = int_to_ptr.hbm [resolvable:$true] %s47
      %s49 = sshll.u32 [#allocation6], 4
      %s50 = int_to_ptr.vmem [resolvable:$true] %s49
      %55 = dma.hbm_to_vmem [thread:$0]  %s48, 1024, %s50, [#allocation7], 128, 128, 8
    $region21: #{tpu_custom_call.1} parent=1 // pred_fallthru
      _
    // Predicated region
    $region22: #{tpu_custom_call.1} parent=1 // pred_check
      _
    $region23: #{tpu_custom_call.1} parent=1 // pred_check_branch
      %57 = sbr.rel (0) target = $region25
    $region24: #{tpu_custom_call.1} parent=1 // pred_region
      _
    $region25: #{tpu_custom_call.1} parent=1 // pred_fallthru
      _
    // Predicated region
    $region26: #{tpu_custom_call.1} parent=1 // pred_check
      _
    $region27: #{tpu_custom_call.1} parent=1 // pred_check_branch
      %59 = sbr.rel (0) target = $region29
    $region28: #{tpu_custom_call.1} parent=1 // pred_region
      %61 = vsyncadd [#allocation7], 0
      %s62 = sshll.u32 %s6, 4
      %s63 = int_to_ptr.hbm [resolvable:$true] %s62
      %s64 = sshll.u32 [#allocation8], 4
      %s65 = int_to_ptr.vmem [resolvable:$true] %s64
      %70 = dma.hbm_to_vmem [thread:$0]  %s63, 512, %s65, [#allocation7], 128, 128, 8
    $region29: #{tpu_custom_call.1} parent=1 // pred_fallthru
      _
    // Predicated region
    $region30: #{tpu_custom_call.1} parent=1 // pred_check
      _
    $region31: #{tpu_custom_call.1} parent=1 // pred_check_branch
      %72 = sbr.rel (0) target = $region33
    $region32: #{tpu_custom_call.1} parent=1 // pred_region
      _
    $region33: #{tpu_custom_call.1} parent=1 // pred_fallthru
      _
    // Predicated region
    $region34: #{tpu_custom_call.1} parent=1 // pred_check
      _
    $region35: #{tpu_custom_call.1} parent=1 // pred_check_branch
      %74 = sbr.rel (0) target = $region37
    $region36: #{tpu_custom_call.1} parent=1 // pred_region
      _
    $region37: #{tpu_custom_call.1} parent=1 // pred_fallthru
      _
    // Predicated region
    $region38: #{tpu_custom_call.1} parent=1 // pred_check
      _
    $region39: #{tpu_custom_call.1} parent=1 // pred_check_branch
      %76 = sbr.rel (0) target = $region41
    $region40: #{tpu_custom_call.1} parent=1 // pred_region
      _
    $region41: #{tpu_custom_call.1} parent=1 // pred_fallthru
      _
    // Predicated region
    $region42: #{tpu_custom_call.1} parent=1 // pred_check
      _
    $region43: #{tpu_custom_call.1} parent=1 // pred_check_branch
      %78 = sbr.rel (0) target = $region45
    $region44: #{tpu_custom_call.1} parent=1 // pred_region
      _
    $region45: #{tpu_custom_call.1} parent=1 // pred_fallthru
      _
    // Predicated region
    $region46: #{tpu_custom_call.1} parent=1 // pred_check
      _
    $region47: #{tpu_custom_call.1} parent=1 // pred_check_branch
      %80 = sbr.rel (0) target = $region49
    $region48: #{tpu_custom_call.1} parent=1 // pred_region
      _
    $region49: #{tpu_custom_call.1} parent=1 // pred_fallthru
      _
    // Predicated region
    $region50: #{tpu_custom_call.1} parent=1 // pred_check
      _
    $region51: #{tpu_custom_call.1} parent=1 // pred_check_branch
      %82 = sbr.rel (0) target = $region53
    $region52: #{tpu_custom_call.1} parent=1 // pred_region
      _
    $region53: #{tpu_custom_call.1} parent=1 // pred_fallthru
      _
    // Predicated region
    $region54: #{tpu_custom_call.1} parent=1 // pred_check
      _
    $region55: #{tpu_custom_call.1} parent=1 // pred_check_branch
      %84 = sbr.rel (0) target = $region57
    $region56: #{tpu_custom_call.1} parent=1 // pred_region
      _
    $region57: #{tpu_custom_call.1} parent=1 // pred_fallthru
      _
    // Predicated region
    $region58: #{tpu_custom_call.1} parent=1 // pred_check
      _
    $region59: #{tpu_custom_call.1} parent=1 // pred_check_branch
      %86 = sbr.rel (0) target = $region61
    $region60: #{tpu_custom_call.1} parent=1 // pred_region
      _
    $region61: #{tpu_custom_call.1} parent=1 // pred_fallthru
      _
    // Predicated region
    $region62: #{tpu_custom_call.1} parent=1 // pred_check
      _
    $region63: #{tpu_custom_call.1} parent=1 // pred_check_branch
      %88 = sbr.rel (0) target = $region65
    $region64: #{tpu_custom_call.1} parent=1 // pred_region
      _
    $region65: #{tpu_custom_call.1} parent=1 // pred_fallthru
      _
    // Predicated region
    $region66: #{tpu_custom_call.1} parent=1 // pred_check
      _
    $region67: #{tpu_custom_call.1} parent=1 // pred_check_branch
      %90 = sbr.rel (0) target = $region69
    $region68: #{tpu_custom_call.1} parent=1 // pred_region
      %92 = dma.done [#allocation4], 16
    $region69: #{tpu_custom_call.1} parent=1 // pred_fallthru
      _
    // Predicated region
    $region70: #{tpu_custom_call.1} parent=1 // pred_check
      _
    $region71: #{tpu_custom_call.1} parent=1 // pred_check_branch
      %94 = sbr.rel (0) target = $region73
    $region72: #{tpu_custom_call.1} parent=1 // pred_region
      %96 = dma.done [#allocation7], 1024
    $region73: #{tpu_custom_call.1} parent=1 // pred_fallthru
      _
    // Predicated region
    $region74: #{tpu_custom_call.1} parent=1 // pred_check
      _
    $region75: #{tpu_custom_call.1} parent=1 // pred_check_branch
      %98 = sbr.rel (0) target = $region77
    $region76: #{tpu_custom_call.1} parent=1 // pred_region
      %100 = dma.done [#allocation7], 512
    $region77: #{tpu_custom_call.1} parent=1 // pred_fallthru
      _
    %v101 = vld [vmem:[%s0] sm:$0xff]
    %v102 = vld [vmem:[%s0 + $0x8] sm:$0xff]
    %v103 = vld [vmem:[%s1] sm:$0xf]
    %v104 = vld [vmem:[#allocation3] sm:$0x1]
    %v106 = vperm.slane %v104, 0
    %vm108 = vcmask 31744
    %v110 = vsel %vm108, %v101, 0
    %v113 = vsel %vm108, %v102, 0
    %vm115 = vcmask 1043456
    %v117 = vsel %vm115, %v103, 0
    %119 = vmatpush.msra.mxu0 0.0
    %120 = vmatpush.msra.mxu0 0.0
    %121 = vmatpush.msra.mxu0 0.0
    %122 = vmatpush.msra.mxu0 0.0
    %123 = vmatpush.msra.mxu0 0.0
    %124 = vmatpush.msra.mxu0 0.0
    %125 = vmatpush.msra.mxu0 0.0
    %126 = vmatpush.msra.mxu0 0.0
    %127 = vmatpush.msra.mxu0 0.0
    %128 = vmatpush.msra.mxu0 0.0
    %129 = vmatpush.msra.mxu0 0.0
    %130 = vmatpush.msra.mxu0 0.0
    %131 = vmatpush.msra.mxu0 0.0
    %132 = vmatpush.msra.mxu0 0.0
    %133 = vmatpush.msra.mxu0 0.0
    %134 = vmatpush.msra.mxu0 %v117
    %135 = vmatmul.f32.gmra.mxu0 %v110
    %v136 = vpop.f32.mrf.mxu0
    %v137 = vadd.f32 %v106, %v136
    %138 = vmatmul.f32.gmra.mxu0 %v113
    %v139 = vpop.f32.mrf.mxu0
    %v140 = vadd.f32 %v106, %v139
    %141 = vdwg.mxu0
    %v142 = vld [vmem:[%s2] sm:$0xff]
    %v143 = vld [vmem:[%s2 + $0x8] sm:$0xff]
    %v144 = vld [vmem:[%s2 + $0x10] sm:$0xff]
    %v145 = vld [vmem:[%s2 + $0x18] sm:$0xff]
    %v146 = vld [vmem:[#allocation6] sm:$0xff]
    %v147 = vld [vmem:[#allocation6 + $0x8] sm:$0xff]
    %v148 = vld [vmem:[#allocation6 + $0x10] sm:$0xff]
    %v149 = vld [vmem:[#allocation6 + $0x18] sm:$0xff]
    %v150 = vld [vmem:[#allocation6 + $0x20] sm:$0xff]
    %v151 = vld [vmem:[#allocation6 + $0x28] sm:$0xff]
    %v152 = vld [vmem:[#allocation6 + $0x30] sm:$0xff]
    %v153 = vld [vmem:[#allocation6 + $0x38] sm:$0xff]
    %v154 = vld [vmem:[%s5] sm:$0x1]
    %vm155 = vcmask 261120
    %v157 = vsel %vm155, 0.0, 0
    %159 = vmatpush.msra.mxu0 0.0
    %160 = vmatpush.msra.mxu0 0.0
    %161 = vmatpush.msra.mxu0 0.0
    %162 = vmatpush.msra.mxu0 0.0
    %163 = vmatpush.msra.mxu0 0.0
    %164 = vmatpush.msra.mxu0 0.0
    %165 = vmatpush.msra.mxu0 0.0
    %166 = vmatpush.msra.mxu0 0.0
    %167 = vmatpush.msra.mxu0 0.0
    %168 = vmatpush.msra.mxu0 0.0
    %169 = vmatpush.msra.mxu0 0.0
    %170 = vmatpush.msra.mxu0 0.0
    %171 = vmatpush.msra.mxu0 %v145
    %172 = vmatpush.msra.mxu0 %v144
    %173 = vmatpush.msra.mxu0 %v143
    %174 = vmatpush.msra.mxu0 %v142
    %175 = vmatmul.f32.gmra.mxu0 %v157
    %v176 = vpop.f32.mrf.mxu0
    %v177 = vadd.f32 0.0, %v176
    %178 = vdwg.mxu0
    %v179 = vadd.f32 %v137, %v177
    %v180 = vxor.u32 %v179, 2147483648
    %v181 = vmul.f32 %v180, 1.442695
    %v182 = vpow.pop %v181
    %v183 = vadd.f32 %v182, 1.0
    %v184 = vrcp.pop %v183
    %v185 = vmul.f32 %v183, %v184
    %v186 = vsub.f32 1.0, %v185
    %v187 = vmul.f32 %v184, %v186
    %v188 = vadd.f32 %v184, %v187
    %vm189 = vweird.f32 %v183
    %vm190 = vweird.f32 %v184
    %vm191 = vmor %vm189, %vm190
    %v192 = vsel %vm191, %v184, %v188
    %v193 = vand.u32 2147483647, %v183
    %vm194 = vcmp.eq.f32.partialorder %v193, 8.507059e+37
    %v195 = vand.u32 %v183, 2147483648
    %v196 = vor.u32 1.1754944e-38, %v195
    %v197 = vsel %vm194, %v196, %v192
    %v198 = vmul.f32 1.0, %v197
    %v199 = vtanh.pop %v179
    %v200 = vmul.f32 %v198, 0.0
    %202 = vrot.lane.b32.xlu0 %v199, 64
    %v203 = vpop.permute.xlu0 %202
    %v205 = vmul.f32 %v198, %v203
    %207 = vrot.lane.b32.xlu0 %v205, 32
    %v208 = vpop.permute.xlu0 %207
    %v210 = vadd.f32 %v200, %v208
    %v211 = vtanh.pop %v210
    %213 = vrot.lane.b32.xlu0 %v211, 64
    %v214 = vpop.permute.xlu0 %213
    %v216 = vmul.f32 %v198, %v214
    %218 = vrot.lane.b32.xlu0 %v216, 32
    %v219 = vpop.permute.xlu0 %218
    %v221 = vsel %vm155, %v219, 0.0
    %v223 = vperm.slane %v154, 0
    %vm225 = vcmask 523264
    %v227 = vsel %vm225, %v221, 0
    %229 = vmatpush.msra.mxu0 0.0
    %230 = vmatpush.msra.mxu0 0.0
    %231 = vmatpush.msra.mxu0 0.0
    %232 = vmatpush.msra.mxu0 0.0
    %233 = vmatpush.msra.mxu0 0.0
    %234 = vmatpush.msra.mxu0 0.0
    %235 = vmatpush.msra.mxu0 0.0
    %236 = vmatpush.msra.mxu0 0.0
    %237 = vmatpush.msra.mxu0 %v153
    %238 = vmatpush.msra.mxu0 %v152
    %239 = vmatpush.msra.mxu0 %v151
    %240 = vmatpush.msra.mxu0 %v150
    %241 = vmatpush.msra.mxu0 %v149
    %242 = vmatpush.msra.mxu0 %v148
    %243 = vmatpush.msra.mxu0 %v147
    %244 = vmatpush.msra.mxu0 %v146
    %245 = vmatmul.f32.gmra.mxu0 %v227
    %v246 = vpop.f32.mrf.mxu0
    %v247 = vadd.f32 %v223, %v246
    %248 = vdwg.mxu0
    %v249 = vxor.u32 %v247, 2147483648
    %v250 = vmul.f32 %v249, 1.442695
    %v251 = vpow.pop %v250
    %v252 = vadd.f32 %v251, 1.0
    %v253 = vrcp.pop %v252
    %v254 = vmul.f32 %v252, %v253
    %v255 = vsub.f32 1.0, %v254
    %v256 = vmul.f32 %v253, %v255
    %v257 = vadd.f32 %v253, %v256
    %vm258 = vweird.f32 %v252
    %vm259 = vweird.f32 %v253
    %vm260 = vmor %vm258, %vm259
    %v261 = vsel %vm260, %v253, %v257
    %v262 = vand.u32 2147483647, %v252
    %vm263 = vcmp.eq.f32.partialorder %v262, 8.507059e+37
    %v264 = vand.u32 %v252, 2147483648
    %v265 = vor.u32 1.1754944e-38, %v264
    %v266 = vsel %vm263, %v265, %v261
    %v267 = vmul.f32 1.0, %v266
    %v268 = vtanh.pop %v247
    %v269 = vmul.f32 %v267, 0.0
    %271 = vrot.lane.b32.xlu0 %v268, 64
    %v272 = vpop.permute.xlu0 %271
    %v274 = vmul.f32 %v267, %v272
    %276 = vrot.lane.b32.xlu0 %v274, 32
    %v277 = vpop.permute.xlu0 %276
    %v279 = vadd.f32 %v269, %v277
    %v280 = vtanh.pop %v279
    %282 = vrot.lane.b32.xlu0 %v280, 64
    %v283 = vpop.permute.xlu0 %282
    %v285 = vmul.f32 %v267, %v283
    %v286 = vsel %vm155, %v219, 0
    %288 = vmatpush.msra.mxu0 0.0
    %289 = vmatpush.msra.mxu0 0.0
    %290 = vmatpush.msra.mxu0 0.0
    %291 = vmatpush.msra.mxu0 0.0
    %292 = vmatpush.msra.mxu0 0.0
    %293 = vmatpush.msra.mxu0 0.0
    %294 = vmatpush.msra.mxu0 0.0
    %295 = vmatpush.msra.mxu0 0.0
    %296 = vmatpush.msra.mxu0 0.0
    %297 = vmatpush.msra.mxu0 0.0
    %298 = vmatpush.msra.mxu0 0.0
    %299 = vmatpush.msra.mxu0 0.0
    %300 = vmatpush.msra.mxu0 %v145
    %301 = vmatpush.msra.mxu0 %v144
    %302 = vmatpush.msra.mxu0 %v143
    %303 = vmatpush.msra.mxu0 %v142
    %304 = vmatmul.f32.gmra.mxu0 %v286
    %v305 = vpop.f32.mrf.mxu0
    %v306 = vadd.f32 0.0, %v305
    %307 = vdwg.mxu0
    %v309 = vrot.slane %v306, 6
    %v311 = vadd.f32 %v137, %v309
    %v312 = vxor.u32 %v311, 2147483648
    %v313 = vmul.f32 %v312, 1.442695
    %v314 = vpow.pop %v313
    %v315 = vadd.f32 %v314, 1.0
    %v316 = vrcp.pop %v315
    %v317 = vmul.f32 %v315, %v316
    %v318 = vsub.f32 1.0, %v317
    %v319 = vmul.f32 %v316, %v318
    %v320 = vadd.f32 %v316, %v319
    %vm321 = vweird.f32 %v315
    %vm322 = vweird.f32 %v316
    %vm323 = vmor %vm321, %vm322
    %v324 = vsel %vm323, %v316, %v320
    %v325 = vand.u32 2147483647, %v315
    %vm326 = vcmp.eq.f32.partialorder %v325, 8.507059e+37
    %v327 = vand.u32 %v315, 2147483648
    %v328 = vor.u32 1.1754944e-38, %v327
    %v329 = vsel %vm326, %v328, %v324
    %v330 = vmul.f32 1.0, %v329
    %v331 = vtanh.pop %v311
    %v333 = vrot.slane %v210, 6
    %v335 = vmul.f32 %v330, %v333
    %337 = vrot.lane.b32.xlu0 %v331, 64
    %v338 = vpop.permute.xlu0 %337
    %v340 = vmul.f32 %v330, %v338
    %342 = vrot.lane.b32.xlu0 %v340, 32
    %v343 = vpop.permute.xlu0 %342
    %v345 = vadd.f32 %v335, %v343
    %v346 = vtanh.pop %v345
    %348 = vrot.lane.b32.xlu0 %v346, 64
    %v349 = vpop.permute.xlu0 %348
    %v351 = vmul.f32 %v330, %v349
    %353 = vrot.lane.b32.xlu0 %v351, 32
    %v354 = vpop.permute.xlu0 %353
    %v357 = vrot.slane %v285, 6
    %358 = vrot.lane.b32.xlu0 %v357, 64
    %v359 = vpop.permute.xlu0 %358
    %v361 = vsel %vm155, %v354, %v359
    %v363 = vrot.slane %v361, 2
    %v364 = vsel %vm225, %v363, 0
    %366 = vmatpush.msra.mxu0 0.0
    %367 = vmatpush.msra.mxu0 0.0
    %368 = vmatpush.msra.mxu0 0.0
    %369 = vmatpush.msra.mxu0 0.0
    %370 = vmatpush.msra.mxu0 0.0
    %371 = vmatpush.msra.mxu0 0.0
    %372 = vmatpush.msra.mxu0 0.0
    %373 = vmatpush.msra.mxu0 0.0
    %374 = vmatpush.msra.mxu0 %v153
    %375 = vmatpush.msra.mxu0 %v152
    %376 = vmatpush.msra.mxu0 %v151
    %377 = vmatpush.msra.mxu0 %v150
    %378 = vmatpush.msra.mxu0 %v149
    %379 = vmatpush.msra.mxu0 %v148
    %380 = vmatpush.msra.mxu0 %v147
    %381 = vmatpush.msra.mxu0 %v146
    %382 = vmatmul.f32.gmra.mxu0 %v364
    %v383 = vpop.f32.mrf.mxu0
    %v384 = vadd.f32 %v223, %v383
    %385 = vdwg.mxu0
    %v386 = vxor.u32 %v384, 2147483648
    %v387 = vmul.f32 %v386, 1.442695
    %v388 = vpow.pop %v387
    %v389 = vadd.f32 %v388, 1.0
    %v390 = vrcp.pop %v389
    %v391 = vmul.f32 %v389, %v390
    %v392 = vsub.f32 1.0, %v391
    %v393 = vmul.f32 %v390, %v392
    %v394 = vadd.f32 %v390, %v393
    %vm395 = vweird.f32 %v389
    %vm396 = vweird.f32 %v390
    %vm397 = vmor %vm395, %vm396
    %v398 = vsel %vm397, %v390, %v394
    %v399 = vand.u32 2147483647, %v389
    %vm400 = vcmp.eq.f32.partialorder %v399, 8.507059e+37
    %v401 = vand.u32 %v389, 2147483648
    %v402 = vor.u32 1.1754944e-38, %v401
    %v403 = vsel %vm400, %v402, %v398
    %v404 = vmul.f32 1.0, %v403
    %v405 = vtanh.pop %v384
    %v406 = vmul.f32 %v404, %v279
    %408 = vrot.lane.b32.xlu0 %v405, 64
    %v409 = vpop.permute.xlu0 %408
    %v411 = vmul.f32 %v404, %v409
    %413 = vrot.lane.b32.xlu0 %v411, 32
    %v414 = vpop.permute.xlu0 %413
    %v416 = vadd.f32 %v406, %v414
    %v417 = vtanh.pop %v416
    %419 = vrot.lane.b32.xlu0 %v417, 64
    %v420 = vpop.permute.xlu0 %419
    %v422 = vmul.f32 %v404, %v420
    %v423 = vrot.slane %v351, 2
    %424 = vrot.lane.b32.xlu0 %v423, 32
    %v425 = vpop.permute.xlu0 %424
    %v426 = vsel %vm155, %v425, 0
    %428 = vmatpush.msra.mxu0 0.0
    %429 = vmatpush.msra.mxu0 0.0
    %430 = vmatpush.msra.mxu0 0.0
    %431 = vmatpush.msra.mxu0 0.0
    %432 = vmatpush.msra.mxu0 0.0
    %433 = vmatpush.msra.mxu0 0.0
    %434 = vmatpush.msra.mxu0 0.0
    %435 = vmatpush.msra.mxu0 0.0
    %436 = vmatpush.msra.mxu0 0.0
    %437 = vmatpush.msra.mxu0 0.0
    %438 = vmatpush.msra.mxu0 0.0
    %439 = vmatpush.msra.mxu0 0.0
    %440 = vmatpush.msra.mxu0 %v145
    %441 = vmatpush.msra.mxu0 %v144
    %442 = vmatpush.msra.mxu0 %v143
    %443 = vmatpush.msra.mxu0 %v142
    %444 = vmatmul.f32.gmra.mxu0 %v426
    %v445 = vpop.f32.mrf.mxu0
    %v446 = vadd.f32 0.0, %v445
    %447 = vdwg.mxu0
    %v449 = vrot.slane %v446, 4
    %v451 = vadd.f32 %v137, %v449
    %v452 = vxor.u32 %v451, 2147483648
    %v453 = vmul.f32 %v452, 1.442695
    %v454 = vpow.pop %v453
    %v455 = vadd.f32 %v454, 1.0
    %v456 = vrcp.pop %v455
    %v457 = vmul.f32 %v455, %v456
    %v458 = vsub.f32 1.0, %v457
    %v459 = vmul.f32 %v456, %v458
    %v460 = vadd.f32 %v456, %v459
    %vm461 = vweird.f32 %v455
    %vm462 = vweird.f32 %v456
    %vm463 = vmor %vm461, %vm462
    %v464 = vsel %vm463, %v456, %v460
    %v465 = vand.u32 2147483647, %v455
    %vm466 = vcmp.eq.f32.partialorder %v465, 8.507059e+37
    %v467 = vand.u32 %v455, 2147483648
    %v468 = vor.u32 1.1754944e-38, %v467
    %v469 = vsel %vm466, %v468, %v464
    %v470 = vmul.f32 1.0, %v469
    %v471 = vtanh.pop %v451
    %v473 = vrot.slane %v345, 6
    %v475 = vmul.f32 %v470, %v473
    %477 = vrot.lane.b32.xlu0 %v471, 64
    %v478 = vpop.permute.xlu0 %477
    %v480 = vmul.f32 %v470, %v478
    %482 = vrot.lane.b32.xlu0 %v480, 32
    %v483 = vpop.permute.xlu0 %482
    %v485 = vadd.f32 %v475, %v483
    %v486 = vtanh.pop %v485
    %488 = vrot.lane.b32.xlu0 %v486, 64
    %v489 = vpop.permute.xlu0 %488
    %v491 = vmul.f32 %v470, %v489
    %493 = vrot.lane.b32.xlu0 %v491, 32
    %v494 = vpop.permute.xlu0 %493
    %v497 = vrot.slane %v422, 4
    %498 = vrot.lane.b32.xlu0 %v497, 64
    %v499 = vpop.permute.xlu0 %498
    %v501 = vsel %vm155, %v494, %v499
    %v503 = vrot.slane %v501, 4
    %v504 = vsel %vm225, %v503, 0
    %506 = vmatpush.msra.mxu0 0.0
    %507 = vmatpush.msra.mxu0 0.0
    %508 = vmatpush.msra.mxu0 0.0
    %509 = vmatpush.msra.mxu0 0.0
    %510 = vmatpush.msra.mxu0 0.0
    %511 = vmatpush.msra.mxu0 0.0
    %512 = vmatpush.msra.mxu0 0.0
    %513 = vmatpush.msra.mxu0 0.0
    %514 = vmatpush.msra.mxu0 %v153
    %515 = vmatpush.msra.mxu0 %v152
    %516 = vmatpush.msra.mxu0 %v151
    %517 = vmatpush.msra.mxu0 %v150
    %518 = vmatpush.msra.mxu0 %v149
    %519 = vmatpush.msra.mxu0 %v148
    %520 = vmatpush.msra.mxu0 %v147
    %521 = vmatpush.msra.mxu0 %v146
    %522 = vmatmul.f32.gmra.mxu0 %v504
    %v523 = vpop.f32.mrf.mxu0
    %v524 = vadd.f32 %v223, %v523
    %525 = vdwg.mxu0
    %v526 = vxor.u32 %v524, 2147483648
    %v527 = vmul.f32 %v526, 1.442695
    %v528 = vpow.pop %v527
    %v529 = vadd.f32 %v528, 1.0
    %v530 = vrcp.pop %v529
    %v531 = vmul.f32 %v529, %v530
    %v532 = vsub.f32 1.0, %v531
    %v533 = vmul.f32 %v530, %v532
    %v534 = vadd.f32 %v530, %v533
    %vm535 = vweird.f32 %v529
    %vm536 = vweird.f32 %v530
    %vm537 = vmor %vm535, %vm536
    %v538 = vsel %vm537, %v530, %v534
    %v539 = vand.u32 2147483647, %v529
    %vm540 = vcmp.eq.f32.partialorder %v539, 8.507059e+37
    %v541 = vand.u32 %v529, 2147483648
    %v542 = vor.u32 1.1754944e-38, %v541
    %v543 = vsel %vm540, %v542, %v538
    %v544 = vmul.f32 1.0, %v543
    %v545 = vtanh.pop %v524
    %v546 = vmul.f32 %v544, %v416
    %548 = vrot.lane.b32.xlu0 %v545, 64
    %v549 = vpop.permute.xlu0 %548
    %v551 = vmul.f32 %v544, %v549
    %553 = vrot.lane.b32.xlu0 %v551, 32
    %v554 = vpop.permute.xlu0 %553
    %v556 = vadd.f32 %v546, %v554
    %v557 = vtanh.pop %v556
    %559 = vrot.lane.b32.xlu0 %v557, 64
    %v560 = vpop.permute.xlu0 %559
    %v562 = vmul.f32 %v544, %v560
    %v563 = vrot.slane %v491, 4
    %564 = vrot.lane.b32.xlu0 %v563, 32
    %v565 = vpop.permute.xlu0 %564
    %v566 = vsel %vm155, %v565, 0
    %568 = vmatpush.msra.mxu0 0.0
    %569 = vmatpush.msra.mxu0 0.0
    %570 = vmatpush.msra.mxu0 0.0
    %571 = vmatpush.msra.mxu0 0.0
    %572 = vmatpush.msra.mxu0 0.0
    %573 = vmatpush.msra.mxu0 0.0
    %574 = vmatpush.msra.mxu0 0.0
    %575 = vmatpush.msra.mxu0 0.0
    %576 = vmatpush.msra.mxu0 0.0
    %577 = vmatpush.msra.mxu0 0.0
    %578 = vmatpush.msra.mxu0 0.0
    %579 = vmatpush.msra.mxu0 0.0
    %580 = vmatpush.msra.mxu0 %v145
    %581 = vmatpush.msra.mxu0 %v144
    %582 = vmatpush.msra.mxu0 %v143
    %583 = vmatpush.msra.mxu0 %v142
    %584 = vmatmul.f32.gmra.mxu0 %v566
    %v585 = vpop.f32.mrf.mxu0
    %v586 = vadd.f32 0.0, %v585
    %587 = vdwg.mxu0
    %v589 = vrot.slane %v586, 2
    %v591 = vadd.f32 %v137, %v589
    %v592 = vxor.u32 %v591, 2147483648
    %v593 = vmul.f32 %v592, 1.442695
    %v594 = vpow.pop %v593
    %v595 = vadd.f32 %v594, 1.0
    %v596 = vrcp.pop %v595
    %v597 = vmul.f32 %v595, %v596
    %v598 = vsub.f32 1.0, %v597
    %v599 = vmul.f32 %v596, %v598
    %v600 = vadd.f32 %v596, %v599
    %vm601 = vweird.f32 %v595
    %vm602 = vweird.f32 %v596
    %vm603 = vmor %vm601, %vm602
    %v604 = vsel %vm603, %v596, %v600
    %v605 = vand.u32 2147483647, %v595
    %vm606 = vcmp.eq.f32.partialorder %v605, 8.507059e+37
    %v607 = vand.u32 %v595, 2147483648
    %v608 = vor.u32 1.1754944e-38, %v607
    %v609 = vsel %vm606, %v608, %v604
    %v610 = vmul.f32 1.0, %v609
    %v611 = vtanh.pop %v591
    %v613 = vrot.slane %v485, 6
    %v615 = vmul.f32 %v610, %v613
    %617 = vrot.lane.b32.xlu0 %v611, 64
    %v618 = vpop.permute.xlu0 %617
    %v620 = vmul.f32 %v610, %v618
    %622 = vrot.lane.b32.xlu0 %v620, 32
    %v623 = vpop.permute.xlu0 %622
    %v625 = vadd.f32 %v615, %v623
    %v626 = vtanh.pop %v625
    %628 = vrot.lane.b32.xlu0 %v626, 64
    %v629 = vpop.permute.xlu0 %628
    %v631 = vmul.f32 %v610, %v629
    %633 = vrot.lane.b32.xlu0 %v631, 32
    %v634 = vpop.permute.xlu0 %633
    %v637 = vrot.slane %v562, 2
    %638 = vrot.lane.b32.xlu0 %v637, 64
    %v639 = vpop.permute.xlu0 %638
    %v641 = vsel %vm155, %v634, %v639
    %v643 = vrot.slane %v641, 6
    %v644 = vsel %vm225, %v643, 0
    %646 = vmatpush.msra.mxu0 0.0
    %647 = vmatpush.msra.mxu0 0.0
    %648 = vmatpush.msra.mxu0 0.0
    %649 = vmatpush.msra.mxu0 0.0
    %650 = vmatpush.msra.mxu0 0.0
    %651 = vmatpush.msra.mxu0 0.0
    %652 = vmatpush.msra.mxu0 0.0
    %653 = vmatpush.msra.mxu0 0.0
    %654 = vmatpush.msra.mxu0 %v153
    %655 = vmatpush.msra.mxu0 %v152
    %656 = vmatpush.msra.mxu0 %v151
    %657 = vmatpush.msra.mxu0 %v150
    %658 = vmatpush.msra.mxu0 %v149
    %659 = vmatpush.msra.mxu0 %v148
    %660 = vmatpush.msra.mxu0 %v147
    %661 = vmatpush.msra.mxu0 %v146
    %662 = vmatmul.f32.gmra.mxu0 %v644
    %v663 = vpop.f32.mrf.mxu0
    %v664 = vadd.f32 %v223, %v663
    %665 = vdwg.mxu0
    %v666 = vxor.u32 %v664, 2147483648
    %v667 = vmul.f32 %v666, 1.442695
    %v668 = vpow.pop %v667
    %v669 = vadd.f32 %v668, 1.0
    %v670 = vrcp.pop %v669
    %v671 = vmul.f32 %v669, %v670
    %v672 = vsub.f32 1.0, %v671
    %v673 = vmul.f32 %v670, %v672
    %v674 = vadd.f32 %v670, %v673
    %vm675 = vweird.f32 %v669
    %vm676 = vweird.f32 %v670
    %vm677 = vmor %vm675, %vm676
    %v678 = vsel %vm677, %v670, %v674
    %v679 = vand.u32 2147483647, %v669
    %vm680 = vcmp.eq.f32.partialorder %v679, 8.507059e+37
    %v681 = vand.u32 %v669, 2147483648
    %v682 = vor.u32 1.1754944e-38, %v681
    %v683 = vsel %vm680, %v682, %v678
    %v684 = vmul.f32 1.0, %v683
    %v685 = vtanh.pop %v664
    %v686 = vmul.f32 %v684, %v556
    %688 = vrot.lane.b32.xlu0 %v685, 64
    %v689 = vpop.permute.xlu0 %688
    %v691 = vmul.f32 %v684, %v689
    %693 = vrot.lane.b32.xlu0 %v691, 32
    %v694 = vpop.permute.xlu0 %693
    %v696 = vadd.f32 %v686, %v694
    %v697 = vtanh.pop %v696
    %699 = vrot.lane.b32.xlu0 %v697, 64
    %v700 = vpop.permute.xlu0 %699
    %v702 = vmul.f32 %v684, %v700
    %v703 = vrot.slane %v631, 6
    %704 = vrot.lane.b32.xlu0 %v703, 32
    %v705 = vpop.permute.xlu0 %704
    %v706 = vsel %vm155, %v705, 0
    %708 = vmatpush.msra.mxu0 0.0
    %709 = vmatpush.msra.mxu0 0.0
    %710 = vmatpush.msra.mxu0 0.0
    %711 = vmatpush.msra.mxu0 0.0
    %712 = vmatpush.msra.mxu0 0.0
    %713 = vmatpush.msra.mxu0 0.0
    %714 = vmatpush.msra.mxu0 0.0
    %715 = vmatpush.msra.mxu0 0.0
    %716 = vmatpush.msra.mxu0 0.0
    %717 = vmatpush.msra.mxu0 0.0
    %718 = vmatpush.msra.mxu0 0.0
    %719 = vmatpush.msra.mxu0 0.0
    %720 = vmatpush.msra.mxu0 %v145
    %721 = vmatpush.msra.mxu0 %v144
    %722 = vmatpush.msra.mxu0 %v143
    %723 = vmatpush.msra.mxu0 %v142
    %724 = vmatmul.f32.gmra.mxu0 %v706
    %v725 = vpop.f32.mrf.mxu0
    %v726 = vadd.f32 0.0, %v725
    %727 = vdwg.mxu0
    %v728 = vadd.f32 %v140, %v726
    %v729 = vxor.u32 %v728, 2147483648
    %v730 = vmul.f32 %v729, 1.442695
    %v731 = vpow.pop %v730
    %v732 = vadd.f32 %v731, 1.0
    %v733 = vrcp.pop %v732
    %v734 = vmul.f32 %v732, %v733
    %v735 = vsub.f32 1.0, %v734
    %v736 = vmul.f32 %v733, %v735
    %v737 = vadd.f32 %v733, %v736
    %vm738 = vweird.f32 %v732
    %vm739 = vweird.f32 %v733
    %vm740 = vmor %vm738, %vm739
    %v741 = vsel %vm740, %v733, %v737
    %v742 = vand.u32 2147483647, %v732
    %vm743 = vcmp.eq.f32.partialorder %v742, 8.507059e+37
    %v744 = vand.u32 %v732, 2147483648
    %v745 = vor.u32 1.1754944e-38, %v744
    %v746 = vsel %vm743, %v745, %v741
    %v747 = vmul.f32 1.0, %v746
    %v748 = vtanh.pop %v728
    %v750 = vrot.slane %v625, 6
    %v752 = vmul.f32 %v747, %v750
    %754 = vrot.lane.b32.xlu0 %v748, 64
    %v755 = vpop.permute.xlu0 %754
    %v757 = vmul.f32 %v747, %v755
    %759 = vrot.lane.b32.xlu0 %v757, 32
    %v760 = vpop.permute.xlu0 %759
    %v762 = vadd.f32 %v752, %v760
    %v763 = vtanh.pop %v762
    %765 = vrot.lane.b32.xlu0 %v763, 64
    %v766 = vpop.permute.xlu0 %765
    %v768 = vmul.f32 %v747, %v766
    %770 = vrot.lane.b32.xlu0 %v768, 32
    %v771 = vpop.permute.xlu0 %770
    %774 = vrot.lane.b32.xlu0 %v702, 64
    %v775 = vpop.permute.xlu0 %774
    %v777 = vsel %vm155, %v771, %v775
    %v779 = vsel %vm225, %v777, 0
    %781 = vmatpush.msra.mxu0 0.0
    %782 = vmatpush.msra.mxu0 0.0
    %783 = vmatpush.msra.mxu0 0.0
    %784 = vmatpush.msra.mxu0 0.0
    %785 = vmatpush.msra.mxu0 0.0
    %786 = vmatpush.msra.mxu0 0.0
    %787 = vmatpush.msra.mxu0 0.0
    %788 = vmatpush.msra.mxu0 0.0
    %789 = vmatpush.msra.mxu0 %v153
    %790 = vmatpush.msra.mxu0 %v152
    %791 = vmatpush.msra.mxu0 %v151
    %792 = vmatpush.msra.mxu0 %v150
    %793 = vmatpush.msra.mxu0 %v149
    %794 = vmatpush.msra.mxu0 %v148
    %795 = vmatpush.msra.mxu0 %v147
    %796 = vmatpush.msra.mxu0 %v146
    %797 = vmatmul.f32.gmra.mxu0 %v779
    %v798 = vpop.f32.mrf.mxu0
    %v799 = vadd.f32 %v223, %v798
    %800 = vdwg.mxu0
    %v801 = vxor.u32 %v799, 2147483648
    %v802 = vmul.f32 %v801, 1.442695
    %v803 = vpow.pop %v802
    %v804 = vadd.f32 %v803, 1.0
    %v805 = vrcp.pop %v804
    %v806 = vmul.f32 %v804, %v805
    %v807 = vsub.f32 1.0, %v806
    %v808 = vmul.f32 %v805, %v807
    %v809 = vadd.f32 %v805, %v808
    %vm810 = vweird.f32 %v804
    %vm811 = vweird.f32 %v805
    %vm812 = vmor %vm810, %vm811
    %v813 = vsel %vm812, %v805, %v809
    %v814 = vand.u32 2147483647, %v804
    %vm815 = vcmp.eq.f32.partialorder %v814, 8.507059e+37
    %v816 = vand.u32 %v804, 2147483648
    %v817 = vor.u32 1.1754944e-38, %v816
    %v818 = vsel %vm815, %v817, %v813
    %v819 = vmul.f32 1.0, %v818
    %v820 = vtanh.pop %v799
    %v821 = vmul.f32 %v819, %v696
    %823 = vrot.lane.b32.xlu0 %v820, 64
    %v824 = vpop.permute.xlu0 %823
    %v826 = vmul.f32 %v819, %v824
    %828 = vrot.lane.b32.xlu0 %v826, 32
    %v829 = vpop.permute.xlu0 %828
    %v831 = vadd.f32 %v821, %v829
    %v832 = vtanh.pop %v831
    %834 = vrot.lane.b32.xlu0 %v832, 64
    %v835 = vpop.permute.xlu0 %834
    %v837 = vmul.f32 %v819, %v835
    %v838 = vsel %vm155, %v771, 0
    %840 = vmatpush.msra.mxu0 0.0
    %841 = vmatpush.msra.mxu0 0.0
    %842 = vmatpush.msra.mxu0 0.0
    %843 = vmatpush.msra.mxu0 0.0
    %844 = vmatpush.msra.mxu0 0.0
    %845 = vmatpush.msra.mxu0 0.0
    %846 = vmatpush.msra.mxu0 0.0
    %847 = vmatpush.msra.mxu0 0.0
    %848 = vmatpush.msra.mxu0 0.0
    %849 = vmatpush.msra.mxu0 0.0
    %850 = vmatpush.msra.mxu0 0.0
    %851 = vmatpush.msra.mxu0 0.0
    %852 = vmatpush.msra.mxu0 %v145
    %853 = vmatpush.msra.mxu0 %v144
    %854 = vmatpush.msra.mxu0 %v143
    %855 = vmatpush.msra.mxu0 %v142
    %856 = vmatmul.f32.gmra.mxu0 %v838
    %v857 = vpop.f32.mrf.mxu0
    %v858 = vadd.f32 0.0, %v857
    %859 = vdwg.mxu0
    %v861 = vrot.slane %v858, 6
    %v863 = vadd.f32 %v140, %v861
    %v864 = vxor.u32 %v863, 2147483648
    %v865 = vmul.f32 %v864, 1.442695
    %v866 = vpow.pop %v865
    %v867 = vadd.f32 %v866, 1.0
    %v868 = vrcp.pop %v867
    %v869 = vmul.f32 %v867, %v868
    %v870 = vsub.f32 1.0, %v869
    %v871 = vmul.f32 %v868, %v870
    %v872 = vadd.f32 %v868, %v871
    %vm873 = vweird.f32 %v867
    %vm874 = vweird.f32 %v868
    %vm875 = vmor %vm873, %vm874
    %v876 = vsel %vm875, %v868, %v872
    %v877 = vand.u32 2147483647, %v867
    %vm878 = vcmp.eq.f32.partialorder %v877, 8.507059e+37
    %v879 = vand.u32 %v867, 2147483648
    %v880 = vor.u32 1.1754944e-38, %v879
    %v881 = vsel %vm878, %v880, %v876
    %v882 = vmul.f32 1.0, %v881
    %v883 = vtanh.pop %v863
    %v885 = vrot.slane %v762, 6
    %v887 = vmul.f32 %v882, %v885
    %889 = vrot.lane.b32.xlu0 %v883, 64
    %v890 = vpop.permute.xlu0 %889
    %v892 = vmul.f32 %v882, %v890
    %894 = vrot.lane.b32.xlu0 %v892, 32
    %v895 = vpop.permute.xlu0 %894
    %v897 = vadd.f32 %v887, %v895
    %v898 = vtanh.pop %v897
    %900 = vrot.lane.b32.xlu0 %v898, 64
    %v901 = vpop.permute.xlu0 %900
    %v903 = vmul.f32 %v882, %v901
    %905 = vrot.lane.b32.xlu0 %v903, 32
    %v906 = vpop.permute.xlu0 %905
    %v909 = vrot.slane %v837, 6
    %910 = vrot.lane.b32.xlu0 %v909, 64
    %v911 = vpop.permute.xlu0 %910
    %v913 = vsel %vm155, %v906, %v911
    %v915 = vrot.slane %v913, 2
    %v916 = vsel %vm225, %v915, 0
    %918 = vmatpush.msra.mxu0 0.0
    %919 = vmatpush.msra.mxu0 0.0
    %920 = vmatpush.msra.mxu0 0.0
    %921 = vmatpush.msra.mxu0 0.0
    %922 = vmatpush.msra.mxu0 0.0
    %923 = vmatpush.msra.mxu0 0.0
    %924 = vmatpush.msra.mxu0 0.0
    %925 = vmatpush.msra.mxu0 0.0
    %926 = vmatpush.msra.mxu0 %v153
    %927 = vmatpush.msra.mxu0 %v152
    %928 = vmatpush.msra.mxu0 %v151
    %929 = vmatpush.msra.mxu0 %v150
    %930 = vmatpush.msra.mxu0 %v149
    %931 = vmatpush.msra.mxu0 %v148
    %932 = vmatpush.msra.mxu0 %v147
    %933 = vmatpush.msra.mxu0 %v146
    %934 = vmatmul.f32.gmra.mxu0 %v916
    %v935 = vpop.f32.mrf.mxu0
    %v936 = vadd.f32 %v223, %v935
    %937 = vdwg.mxu0
    %v938 = vxor.u32 %v936, 2147483648
    %v939 = vmul.f32 %v938, 1.442695
    %v940 = vpow.pop %v939
    %v941 = vadd.f32 %v940, 1.0
    %v942 = vrcp.pop %v941
    %v943 = vmul.f32 %v941, %v942
    %v944 = vsub.f32 1.0, %v943
    %v945 = vmul.f32 %v942, %v944
    %v946 = vadd.f32 %v942, %v945
    %vm947 = vweird.f32 %v941
    %vm948 = vweird.f32 %v942
    %vm949 = vmor %vm947, %vm948
    %v950 = vsel %vm949, %v942, %v946
    %v951 = vand.u32 2147483647, %v941
    %vm952 = vcmp.eq.f32.partialorder %v951, 8.507059e+37
    %v953 = vand.u32 %v941, 2147483648
    %v954 = vor.u32 1.1754944e-38, %v953
    %v955 = vsel %vm952, %v954, %v950
    %v956 = vmul.f32 1.0, %v955
    %v957 = vtanh.pop %v936
    %v958 = vmul.f32 %v956, %v831
    %960 = vrot.lane.b32.xlu0 %v957, 64
    %v961 = vpop.permute.xlu0 %960
    %v963 = vmul.f32 %v956, %v961
    %965 = vrot.lane.b32.xlu0 %v963, 32
    %v966 = vpop.permute.xlu0 %965
    %v968 = vadd.f32 %v958, %v966
    %v969 = vtanh.pop %v968
    %971 = vrot.lane.b32.xlu0 %v969, 64
    %v972 = vpop.permute.xlu0 %971
    %v974 = vmul.f32 %v956, %v972
    %v975 = vrot.slane %v903, 2
    %976 = vrot.lane.b32.xlu0 %v975, 32
    %v977 = vpop.permute.xlu0 %976
    %v978 = vsel %vm155, %v977, 0
    %980 = vmatpush.msra.mxu0 0.0
    %981 = vmatpush.msra.mxu0 0.0
    %982 = vmatpush.msra.mxu0 0.0
    %983 = vmatpush.msra.mxu0 0.0
    %984 = vmatpush.msra.mxu0 0.0
    %985 = vmatpush.msra.mxu0 0.0
    %986 = vmatpush.msra.mxu0 0.0
    %987 = vmatpush.msra.mxu0 0.0
    %988 = vmatpush.msra.mxu0 0.0
    %989 = vmatpush.msra.mxu0 0.0
    %990 = vmatpush.msra.mxu0 0.0
    %991 = vmatpush.msra.mxu0 0.0
    %992 = vmatpush.msra.mxu0 %v145
    %993 = vmatpush.msra.mxu0 %v144
    %994 = vmatpush.msra.mxu0 %v143
    %995 = vmatpush.msra.mxu0 %v142
    %996 = vmatmul.f32.gmra.mxu0 %v978
    %v997 = vpop.f32.mrf.mxu0
    %v998 = vadd.f32 0.0, %v997
    %999 = vdwg.mxu0
    %v1001 = vrot.slane %v998, 4
    %v1003 = vadd.f32 %v140, %v1001
    %v1004 = vxor.u32 %v1003, 2147483648
    %v1005 = vmul.f32 %v1004, 1.442695
    %v1006 = vpow.pop %v1005
    %v1007 = vadd.f32 %v1006, 1.0
    %v1008 = vrcp.pop %v1007
    %v1009 = vmul.f32 %v1007, %v1008
    %v1010 = vsub.f32 1.0, %v1009
    %v1011 = vmul.f32 %v1008, %v1010
    %v1012 = vadd.f32 %v1008, %v1011
    %vm1013 = vweird.f32 %v1007
    %vm1014 = vweird.f32 %v1008
    %vm1015 = vmor %vm1013, %vm1014
    %v1016 = vsel %vm1015, %v1008, %v1012
    %v1017 = vand.u32 2147483647, %v1007
    %vm1018 = vcmp.eq.f32.partialorder %v1017, 8.507059e+37
    %v1019 = vand.u32 %v1007, 2147483648
    %v1020 = vor.u32 1.1754944e-38, %v1019
    %v1021 = vsel %vm1018, %v1020, %v1016
    %v1022 = vmul.f32 1.0, %v1021
    %v1023 = vtanh.pop %v1003
    %v1025 = vrot.slane %v897, 6
    %v1027 = vmul.f32 %v1022, %v1025
    %1029 = vrot.lane.b32.xlu0 %v1023, 64
    %v1030 = vpop.permute.xlu0 %1029
    %v1032 = vmul.f32 %v1022, %v1030
    %1034 = vrot.lane.b32.xlu0 %v1032, 32
    %v1035 = vpop.permute.xlu0 %1034
    %v1037 = vadd.f32 %v1027, %v1035
    %v1038 = vtanh.pop %v1037
    %1040 = vrot.lane.b32.xlu0 %v1038, 64
    %v1041 = vpop.permute.xlu0 %1040
    %v1043 = vmul.f32 %v1022, %v1041
    %1045 = vrot.lane.b32.xlu0 %v1043, 32
    %v1046 = vpop.permute.xlu0 %1045
    %v1049 = vrot.slane %v974, 4
    %1050 = vrot.lane.b32.xlu0 %v1049, 64
    %v1051 = vpop.permute.xlu0 %1050
    %v1053 = vsel %vm155, %v1046, %v1051
    %v1055 = vrot.slane %v1053, 4
    %v1056 = vsel %vm225, %v1055, 0
    %1058 = vmatpush.msra.mxu0 0.0
    %1059 = vmatpush.msra.mxu0 0.0
    %1060 = vmatpush.msra.mxu0 0.0
    %1061 = vmatpush.msra.mxu0 0.0
    %1062 = vmatpush.msra.mxu0 0.0
    %1063 = vmatpush.msra.mxu0 0.0
    %1064 = vmatpush.msra.mxu0 0.0
    %1065 = vmatpush.msra.mxu0 0.0
    %1066 = vmatpush.msra.mxu0 %v153
    %1067 = vmatpush.msra.mxu0 %v152
    %1068 = vmatpush.msra.mxu0 %v151
    %1069 = vmatpush.msra.mxu0 %v150
    %1070 = vmatpush.msra.mxu0 %v149
    %1071 = vmatpush.msra.mxu0 %v148
    %1072 = vmatpush.msra.mxu0 %v147
    %1073 = vmatpush.msra.mxu0 %v146
    %1074 = vmatmul.f32.gmra.mxu0 %v1056
    %v1075 = vpop.f32.mrf.mxu0
    %v1076 = vadd.f32 %v223, %v1075
    %1077 = vdwg.mxu0
    %v1078 = vxor.u32 %v1076, 2147483648
    %v1079 = vmul.f32 %v1078, 1.442695
    %v1080 = vpow.pop %v1079
    %v1081 = vadd.f32 %v1080, 1.0
    %v1082 = vrcp.pop %v1081
    %v1083 = vmul.f32 %v1081, %v1082
    %v1084 = vsub.f32 1.0, %v1083
    %v1085 = vmul.f32 %v1082, %v1084
    %v1086 = vadd.f32 %v1082, %v1085
    %vm1087 = vweird.f32 %v1081
    %vm1088 = vweird.f32 %v1082
    %vm1089 = vmor %vm1087, %vm1088
    %v1090 = vsel %vm1089, %v1082, %v1086
    %v1091 = vand.u32 2147483647, %v1081
    %vm1092 = vcmp.eq.f32.partialorder %v1091, 8.507059e+37
    %v1093 = vand.u32 %v1081, 2147483648
    %v1094 = vor.u32 1.1754944e-38, %v1093
    %v1095 = vsel %vm1092, %v1094, %v1090
    %v1096 = vmul.f32 1.0, %v1095
    %v1097 = vtanh.pop %v1076
    %v1098 = vmul.f32 %v1096, %v968
    %1100 = vrot.lane.b32.xlu0 %v1097, 64
    %v1101 = vpop.permute.xlu0 %1100
    %v1103 = vmul.f32 %v1096, %v1101
    %1105 = vrot.lane.b32.xlu0 %v1103, 32
    %v1106 = vpop.permute.xlu0 %1105
    %v1108 = vadd.f32 %v1098, %v1106
    %v1109 = vtanh.pop %v1108
    %1111 = vrot.lane.b32.xlu0 %v1109, 64
    %v1112 = vpop.permute.xlu0 %1111
    %v1114 = vmul.f32 %v1096, %v1112
    %v1115 = vrot.slane %v1043, 4
    %1116 = vrot.lane.b32.xlu0 %v1115, 32
    %v1117 = vpop.permute.xlu0 %1116
    %v1118 = vsel %vm155, %v1117, 0
    %1120 = vmatpush.msra.mxu0 0.0
    %1121 = vmatpush.msra.mxu0 0.0
    %1122 = vmatpush.msra.mxu0 0.0
    %1123 = vmatpush.msra.mxu0 0.0
    %1124 = vmatpush.msra.mxu0 0.0
    %1125 = vmatpush.msra.mxu0 0.0
    %1126 = vmatpush.msra.mxu0 0.0
    %1127 = vmatpush.msra.mxu0 0.0
    %1128 = vmatpush.msra.mxu0 0.0
    %1129 = vmatpush.msra.mxu0 0.0
    %1130 = vmatpush.msra.mxu0 0.0
    %1131 = vmatpush.msra.mxu0 0.0
    %1132 = vmatpush.msra.mxu0 %v145
    %1133 = vmatpush.msra.mxu0 %v144
    %1134 = vmatpush.msra.mxu0 %v143
    %1135 = vmatpush.msra.mxu0 %v142
    %1136 = vmatmul.f32.gmra.mxu0 %v1118
    %v1137 = vpop.f32.mrf.mxu0
    %v1138 = vadd.f32 0.0, %v1137
    %1139 = vdwg.mxu0
    %v1141 = vrot.slane %v1138, 2
    %v1143 = vadd.f32 %v140, %v1141
    %v1144 = vxor.u32 %v1143, 2147483648
    %v1145 = vmul.f32 %v1144, 1.442695
    %v1146 = vpow.pop %v1145
    %v1147 = vadd.f32 %v1146, 1.0
    %v1148 = vrcp.pop %v1147
    %v1149 = vmul.f32 %v1147, %v1148
    %v1150 = vsub.f32 1.0, %v1149
    %v1151 = vmul.f32 %v1148, %v1150
    %v1152 = vadd.f32 %v1148, %v1151
    %vm1153 = vweird.f32 %v1147
    %vm1154 = vweird.f32 %v1148
    %vm1155 = vmor %vm1153, %vm1154
    %v1156 = vsel %vm1155, %v1148, %v1152
    %v1157 = vand.u32 2147483647, %v1147
    %vm1158 = vcmp.eq.f32.partialorder %v1157, 8.507059e+37
    %v1159 = vand.u32 %v1147, 2147483648
    %v1160 = vor.u32 1.1754944e-38, %v1159
    %v1161 = vsel %vm1158, %v1160, %v1156
    %v1162 = vmul.f32 1.0, %v1161
    %v1163 = vtanh.pop %v1143
    %v1165 = vrot.slane %v1037, 6
    %v1167 = vmul.f32 %v1162, %v1165
    %1169 = vrot.lane.b32.xlu0 %v1163, 64
    %v1170 = vpop.permute.xlu0 %1169
    %v1172 = vmul.f32 %v1162, %v1170
    %1174 = vrot.lane.b32.xlu0 %v1172, 32
    %v1175 = vpop.permute.xlu0 %1174
    %v1177 = vadd.f32 %v1167, %v1175
    %v1178 = vtanh.pop %v1177
    %1180 = vrot.lane.b32.xlu0 %v1178, 64
    %v1181 = vpop.permute.xlu0 %1180
    %v1183 = vmul.f32 %v1162, %v1181
    %1185 = vrot.lane.b32.xlu0 %v1183, 32
    %v1186 = vpop.permute.xlu0 %1185
    %v1189 = vrot.slane %v1114, 2
    %1190 = vrot.lane.b32.xlu0 %v1189, 64
    %v1191 = vpop.permute.xlu0 %1190
    %v1193 = vsel %vm155, %v1186, %v1191
    %v1195 = vrot.slane %v1193, 6
    %v1196 = vsel %vm225, %v1195, 0
    %1198 = vmatpush.msra.mxu0 0.0
    %1199 = vmatpush.msra.mxu0 0.0
    %1200 = vmatpush.msra.mxu0 0.0
    %1201 = vmatpush.msra.mxu0 0.0
    %1202 = vmatpush.msra.mxu0 0.0
    %1203 = vmatpush.msra.mxu0 0.0
    %1204 = vmatpush.msra.mxu0 0.0
    %1205 = vmatpush.msra.mxu0 0.0
    %1206 = vmatpush.msra.mxu0 %v153
    %1207 = vmatpush.msra.mxu0 %v152
    %1208 = vmatpush.msra.mxu0 %v151
    %1209 = vmatpush.msra.mxu0 %v150
    %1210 = vmatpush.msra.mxu0 %v149
    %1211 = vmatpush.msra.mxu0 %v148
    %1212 = vmatpush.msra.mxu0 %v147
    %1213 = vmatpush.msra.mxu0 %v146
    %1214 = vmatmul.f32.gmra.mxu0 %v1196
    %v1215 = vpop.f32.mrf.mxu0
    %v1216 = vadd.f32 %v223, %v1215
    %1217 = vdwg.mxu0
    %v1218 = vxor.u32 %v1216, 2147483648
    %v1219 = vmul.f32 %v1218, 1.442695
    %v1220 = vpow.pop %v1219
    %v1221 = vadd.f32 %v1220, 1.0
    %v1222 = vrcp.pop %v1221
    %v1223 = vmul.f32 %v1221, %v1222
    %v1224 = vsub.f32 1.0, %v1223
    %v1225 = vmul.f32 %v1222, %v1224
    %v1226 = vadd.f32 %v1222, %v1225
    %vm1227 = vweird.f32 %v1221
    %vm1228 = vweird.f32 %v1222
    %vm1229 = vmor %vm1227, %vm1228
    %v1230 = vsel %vm1229, %v1222, %v1226
    %v1231 = vand.u32 2147483647, %v1221
    %vm1232 = vcmp.eq.f32.partialorder %v1231, 8.507059e+37
    %v1233 = vand.u32 %v1221, 2147483648
    %v1234 = vor.u32 1.1754944e-38, %v1233
    %v1235 = vsel %vm1232, %v1234, %v1230
    %v1236 = vmul.f32 1.0, %v1235
    %v1237 = vtanh.pop %v1216
    %v1238 = vmul.f32 %v1236, %v1108
    %1240 = vrot.lane.b32.xlu0 %v1237, 64
    %v1241 = vpop.permute.xlu0 %1240
    %v1243 = vmul.f32 %v1236, %v1241
    %1245 = vrot.lane.b32.xlu0 %v1243, 32
    %v1246 = vpop.permute.xlu0 %1245
    %v1248 = vadd.f32 %v1238, %v1246
    %v1249 = vtanh.pop %v1248
    %1251 = vrot.lane.b32.xlu0 %v1249, 64
    %v1252 = vpop.permute.xlu0 %1251
    %v1254 = vmul.f32 %v1236, %v1252
    %v1255 = vrot.slane %v285, 1
    %v1257 = vrot.slane %v562, 7
    %v1259 = vrot.slane %v702, 6
    %v1261 = vrot.slane %v837, 5
    %v1264 = vrot.slane %v1114, 3
    %v1267 = vrot.slane %v1254, 2
    %vm1269 = vcmask 1040384
    %v1270 = vsel %vm1269, %v1255, %v422
    %vm1271 = vcmask 1041408
    %v1272 = vsel %vm1271, %v1270, %v1257
    %vm1273 = vcmask 1042432
    %v1274 = vsel %vm1273, %v1272, %v1259
    %v1275 = vsel %vm115, %v1274, %v1261
    %vm1276 = vcmask 1044480
    %v1277 = vsel %vm1276, %v1275, %v1049
    %vm1278 = vcmask 1045504
    %v1279 = vsel %vm1278, %v1277, %v1264
    %vm1280 = vcmask 1046528
    %v1281 = vsel %vm1280, %v1279, %v1267
    %v1282 = vld [vmem:[#allocation8] sm:$0xff]
    %v1283 = vld [vmem:[#allocation8 + $0x8] sm:$0xff]
    %v1284 = vld [vmem:[#allocation8 + $0x10] sm:$0xff]
    %v1285 = vld [vmem:[#allocation8 + $0x18] sm:$0xff]
    %v1286 = vld [vmem:[%s7] sm:$0x1]
    %v1288 = vperm.slane %v1286, 0
    %1291 = vrot.lane.b32.xlu0 %v1281, 32
    %v1292 = vpop.permute.xlu0 %1291
    %v1293 = vsel %vm155, %v1292, 0
    %1295 = vmatpush.msra.mxu0 0.0
    %1296 = vmatpush.msra.mxu0 0.0
    %1297 = vmatpush.msra.mxu0 0.0
    %1298 = vmatpush.msra.mxu0 0.0
    %1299 = vmatpush.msra.mxu0 0.0
    %1300 = vmatpush.msra.mxu0 0.0
    %1301 = vmatpush.msra.mxu0 0.0
    %1302 = vmatpush.msra.mxu0 0.0
    %1303 = vmatpush.msra.mxu0 0.0
    %1304 = vmatpush.msra.mxu0 0.0
    %1305 = vmatpush.msra.mxu0 0.0
    %1306 = vmatpush.msra.mxu0 0.0
    %1307 = vmatpush.msra.mxu0 %v1285
    %1308 = vmatpush.msra.mxu0 %v1284
    %1309 = vmatpush.msra.mxu0 %v1283
    %1310 = vmatpush.msra.mxu0 %v1282
    %1311 = vmatmul.f32.gmra.mxu0 %v1293
    %v1312 = vpop.f32.mrf.mxu0
    %v1313 = vadd.f32 %v1288, %v1312
    %1314 = vdwg.mxu0
    %v1315 = vld [vmem:[%s8] sm:$0xff]
    %v1316 = vld [vmem:[%s8 + $0x8] sm:$0xff]
    %v1317 = vld [vmem:[%s8 + $0x10] sm:$0xff]
    %v1318 = vld [vmem:[%s8 + $0x18] sm:$0xff]
    %v1319 = vld [vmem:[%s8 + $0x20] sm:$0xff]
    %v1320 = vld [vmem:[%s8 + $0x28] sm:$0xff]
    %v1321 = vld [vmem:[%s8 + $0x30] sm:$0xff]
    %v1322 = vld [vmem:[%s8 + $0x38] sm:$0xff]
    %v1323 = vld [vmem:[%s8 + $0x40] sm:$0xff]
    %v1324 = vld [vmem:[%s8 + $0x48] sm:$0xff]
    %v1325 = vld [vmem:[%s8 + $0x50] sm:$0xff]
    %v1326 = vld [vmem:[%s8 + $0x58] sm:$0xff]
    %v1327 = vld [vmem:[%s8 + $0x60] sm:$0x3]
    %v1328 = vld [vmem:[%s8 + $0x68] sm:$0x3]
    %v1329 = vld [vmem:[%s9] sm:$0x3]
    %v1331 = vperm.slane %v1329, 0
    %v1332 = vperm.slane %v1329, 1
    %vm1335 = vcmask 408576
    %v1337 = vsel %vm1335, %v1313, 0
    %v1340 = vsel %vm1271, %v1327, 0
    %v1343 = vsel %vm1271, %v1328, 0
    %1345 = vmatpush.msra.mxu0 0.0
    %1346 = vmatpush.msra.mxu0 0.0
    %1347 = vmatpush.msra.mxu0 0.0
    %1348 = vmatpush.msra.mxu0 0.0
    %1349 = vmatpush.msra.mxu0 0.0
    %1350 = vmatpush.msra.mxu0 0.0
    %1351 = vmatpush.msra.mxu0 0.0
    %1352 = vmatpush.msra.mxu0 0.0
    %1353 = vmatpush.msra.mxu0 0.0
    %1354 = vmatpush.msra.mxu0 %v1340
    %1355 = vmatpush.msra.mxu0 %v1325
    %1356 = vmatpush.msra.mxu0 %v1323
    %1357 = vmatpush.msra.mxu0 %v1321
    %1358 = vmatpush.msra.mxu0 %v1319
    %1359 = vmatpush.msra.mxu0 %v1317
    %1360 = vmatpush.msra.mxu0 %v1315
    %1361 = vmatmul.f32.gmra.mxu0 %v1337
    %v1362 = vpop.f32.mrf.mxu0
    %v1363 = vadd.f32 %v1331, %v1362
    %1364 = vdwg.mxu0
    %1365 = vmatpush.msra.mxu0 0.0
    %1366 = vmatpush.msra.mxu0 0.0
    %1367 = vmatpush.msra.mxu0 0.0
    %1368 = vmatpush.msra.mxu0 0.0
    %1369 = vmatpush.msra.mxu0 0.0
    %1370 = vmatpush.msra.mxu0 0.0
    %1371 = vmatpush.msra.mxu0 0.0
    %1372 = vmatpush.msra.mxu0 0.0
    %1373 = vmatpush.msra.mxu0 0.0
    %1374 = vmatpush.msra.mxu0 %v1343
    %1375 = vmatpush.msra.mxu0 %v1326
    %1376 = vmatpush.msra.mxu0 %v1324
    %1377 = vmatpush.msra.mxu0 %v1322
    %1378 = vmatpush.msra.mxu0 %v1320
    %1379 = vmatpush.msra.mxu0 %v1318
    %1380 = vmatpush.msra.mxu0 %v1316
    %1381 = vmatmul.f32.gmra.mxu0 %v1337
    %v1382 = vpop.f32.mrf.mxu0
    %v1383 = vadd.f32 %v1332, %v1382
    %1384 = vdwg.mxu0
    %v1385 = vmax.f32 %v1363, 0.0
    %v1386 = vmax.f32 %v1383, 0.0
    %v1387 = vld [vmem:[%s10] sm:$0xff]
    %v1388 = vld [vmem:[%s10 + $0x8] sm:$0xff]
    %v1389 = vld [vmem:[%s10 + $0x10] sm:$0xff]
    %v1390 = vld [vmem:[%s10 + $0x18] sm:$0xff]
    %v1391 = vld [vmem:[%s10 + $0x20] sm:$0xff]
    %v1392 = vld [vmem:[%s10 + $0x28] sm:$0xff]
    %v1393 = vld [vmem:[%s10 + $0x30] sm:$0xff]
    %v1394 = vld [vmem:[%s10 + $0x38] sm:$0xff]
    %v1395 = vld [vmem:[%s10 + $0x40] sm:$0xff]
    %v1396 = vld [vmem:[%s10 + $0x48] sm:$0xff]
    %v1397 = vld [vmem:[%s10 + $0x50] sm:$0xff]
    %v1398 = vld [vmem:[%s10 + $0x58] sm:$0xff]
    %v1399 = vld [vmem:[%s10 + $0x60] sm:$0xff]
    %v1400 = vld [vmem:[%s10 + $0x68] sm:$0xff]
    %v1401 = vld [vmem:[%s10 + $0x70] sm:$0xff]
    %v1402 = vld [vmem:[%s10 + $0x78] sm:$0xff]
    %v1403 = vld [vmem:[%s11] sm:$0x1]
    %v1405 = vperm.slane %v1403, 0
    %1407 = vmatpush.msra.mxu0 %v1402
    %1408 = vmatpush.msra.mxu0 %v1401
    %1409 = vmatpush.msra.mxu0 %v1400
    %1410 = vmatpush.msra.mxu0 %v1399
    %1411 = vmatpush.msra.mxu0 %v1398
    %1412 = vmatpush.msra.mxu0 %v1397
    %1413 = vmatpush.msra.mxu0 %v1396
    %1414 = vmatpush.msra.mxu0 %v1395
    %1415 = vmatpush.msra.mxu0 %v1394
    %1416 = vmatpush.msra.mxu0 %v1393
    %1417 = vmatpush.msra.mxu0 %v1392
    %1418 = vmatpush.msra.mxu0 %v1391
    %1419 = vmatpush.msra.mxu0 %v1390
    %1420 = vmatpush.msra.mxu0 %v1389
    %1421 = vmatpush.msra.mxu0 %v1388
    %1422 = vmatpush.msra.mxu0 %v1387
    %1423 = vmatmul.f32.gmra.mxu0 %v1385
    %v1424 = vpop.f32.mrf.mxu0
    %v1425 = vadd.f32 %v1405, %v1424
    %1426 = vdwg.mxu0
    %v1427 = vmax.f32 %v1425, 0.0
    %v1428 = vld [vmem:[%s12] sm:$0xff]
    %v1429 = vld [vmem:[%s12 + $0x8] sm:$0xff]
    %v1430 = vld [vmem:[%s12 + $0x10] sm:$0xff]
    %v1431 = vld [vmem:[%s12 + $0x18] sm:$0xff]
    %v1432 = vld [vmem:[%s12 + $0x20] sm:$0xff]
    %v1433 = vld [vmem:[%s12 + $0x28] sm:$0xff]
    %v1434 = vld [vmem:[%s12 + $0x30] sm:$0xff]
    %v1435 = vld [vmem:[%s12 + $0x38] sm:$0xff]
    %v1436 = vld [vmem:[%s12 + $0x40] sm:$0xff]
    %v1437 = vld [vmem:[%s12 + $0x48] sm:$0xff]
    %v1438 = vld [vmem:[%s12 + $0x50] sm:$0xff]
    %v1439 = vld [vmem:[%s12 + $0x58] sm:$0xff]
    %v1440 = vld [vmem:[%s12 + $0x60] sm:$0xff]
    %v1441 = vld [vmem:[%s12 + $0x68] sm:$0xff]
    %v1442 = vld [vmem:[%s12 + $0x70] sm:$0xff]
    %v1443 = vld [vmem:[%s12 + $0x78] sm:$0xff]
    %v1444 = vld [vmem:[#allocation2] sm:$0x1]
    %v1446 = vperm.slane %v1444, 0
    %1448 = vmatpush.msra.mxu0 %v1443
    %1449 = vmatpush.msra.mxu0 %v1442
    %1450 = vmatpush.msra.mxu0 %v1441
    %1451 = vmatpush.msra.mxu0 %v1440
    %1452 = vmatpush.msra.mxu0 %v1439
    %1453 = vmatpush.msra.mxu0 %v1438
    %1454 = vmatpush.msra.mxu0 %v1437
    %1455 = vmatpush.msra.mxu0 %v1436
    %1456 = vmatpush.msra.mxu0 %v1435
    %1457 = vmatpush.msra.mxu0 %v1434
    %1458 = vmatpush.msra.mxu0 %v1433
    %1459 = vmatpush.msra.mxu0 %v1432
    %1460 = vmatpush.msra.mxu0 %v1431
    %1461 = vmatpush.msra.mxu0 %v1430
    %1462 = vmatpush.msra.mxu0 %v1429
    %1463 = vmatpush.msra.mxu0 %v1428
    %1464 = vmatmul.f32.gmra.mxu0 %v1427
    %v1465 = vpop.f32.mrf.mxu0
    %v1466 = vadd.f32 %v1446, %v1465
    %1467 = vdwg.mxu0
    %v1468 = vld [vmem:[%s14] sm:$0xff]
    %v1469 = vld [vmem:[%s14 + $0x8] sm:$0xff]
    %v1470 = vld [vmem:[%s14 + $0x10] sm:$0xff]
    %v1471 = vld [vmem:[%s14 + $0x18] sm:$0xff]
    %v1472 = vld [vmem:[%s14 + $0x20] sm:$0xff]
    %v1473 = vld [vmem:[%s14 + $0x28] sm:$0xff]
    %v1474 = vld [vmem:[%s14 + $0x30] sm:$0xff]
    %v1475 = vld [vmem:[%s14 + $0x38] sm:$0xff]
    %v1476 = vld [vmem:[%s14 + $0x40] sm:$0xff]
    %v1477 = vld [vmem:[%s14 + $0x48] sm:$0xff]
    %v1478 = vld [vmem:[%s14 + $0x50] sm:$0xff]
    %v1479 = vld [vmem:[%s14 + $0x58] sm:$0xff]
    %v1480 = vld [vmem:[%s14 + $0x60] sm:$0xff]
    %v1481 = vld [vmem:[%s14 + $0x68] sm:$0xff]
    %v1482 = vld [vmem:[%s14 + $0x70] sm:$0xff]
    %v1483 = vld [vmem:[%s14 + $0x78] sm:$0xff]
    %v1484 = vld [vmem:[%s15] sm:$0x1]
    %v1486 = vperm.slane %v1484, 0
    %1488 = vmatpush.msra.mxu0 %v1483
    %1489 = vmatpush.msra.mxu0 %v1482
    %1490 = vmatpush.msra.mxu0 %v1481
    %1491 = vmatpush.msra.mxu0 %v1480
    %1492 = vmatpush.msra.mxu0 %v1479
    %1493 = vmatpush.msra.mxu0 %v1478
    %1494 = vmatpush.msra.mxu0 %v1477
    %1495 = vmatpush.msra.mxu0 %v1476
    %1496 = vmatpush.msra.mxu0 %v1475
    %1497 = vmatpush.msra.mxu0 %v1474
    %1498 = vmatpush.msra.mxu0 %v1473
    %1499 = vmatpush.msra.mxu0 %v1472
    %1500 = vmatpush.msra.mxu0 %v1471
    %1501 = vmatpush.msra.mxu0 %v1470
    %1502 = vmatpush.msra.mxu0 %v1469
    %1503 = vmatpush.msra.mxu0 %v1468
    %1504 = vmatmul.f32.gmra.mxu0 %v1386
    %v1505 = vpop.f32.mrf.mxu0
    %v1506 = vadd.f32 %v1486, %v1505
    %1507 = vdwg.mxu0
    %vm1508 = vcmask 15360
    %v1509 = vsel %vm1508, %v1506, -inf
    %v1510 = vrot.slane %v1509, 4
    %v1511 = vmax.f32 %v1509, %v1510
    %v1512 = vrot.slane %v1511, 2
    %v1513 = vmax.f32 %v1511, %v1512
    %v1514 = vrot.slane %v1513, 1
    %v1515 = vmax.f32 %v1513, %v1514
    %v1516 = vsub.f32 %v1506, %v1515
    %v1517 = vmul.f32 %v1516, 1.442695
    %v1518 = vpow.pop %v1517
    %v1519 = vsel %vm1508, %v1518, 0.0
    %v1520 = vrot.slane %v1519, 4
    %v1521 = vadd.f32 %v1519, %v1520
    %v1522 = vrot.slane %v1521, 2
    %v1523 = vadd.f32 %v1521, %v1522
    %v1524 = vrot.slane %v1523, 1
    %v1525 = vadd.f32 %v1523, %v1524
    %v1526 = vlog2.pop %v1525
    %v1527 = vmul.f32 %v1526, 0.6931472
    %v1528 = vadd.f32 %v1527, %v1515
    %v1529 = vsub.f32 %v1506, %v1528
    %1530 = vst [vmem:[#allocation9] sm:$0xff] 0.0
    %vm1531 = vcmask 7168
    %1532 = vst.msk [vmem:[#allocation9] sm:$0xff] %vm1531, %v1466
    %1534 = vrot.lane.b32.xlu0 %v1529, 1
    %v1535 = vpop.permute.xlu0 %1534
    %vm1537 = vcmask 23560
    %1538 = vst.msk [vmem:[#allocation9] sm:$0xff] %vm1537, %v1535
    // Predicated region
    $region78: #{tpu_custom_call.1} parent=1 // pred_check
      _
    $region79: #{tpu_custom_call.1} parent=1 // pred_check_branch
      %1540 = sbr.rel (0) target = $region81
    $region80: #{tpu_custom_call.1} parent=1 // pred_region
      %1542 = vsyncadd [#allocation5], 0
      %s1544 = sshll.u32 [#allocation9], 4
      %s1545 = int_to_ptr.vmem [resolvable:$true] %s1544
      %s1546 = sshll.u32 %s16, 4
      %s1547 = int_to_ptr.hbm [resolvable:$true] %s1546
      %1549 = dma.vmem_to_hbm [thread:$0]  %s1545, 128, %s1547, [#allocation5]
    $region81: #{tpu_custom_call.1} parent=1 // pred_fallthru
      _
    // Predicated region
    $region82: #{tpu_custom_call.1} parent=1 // pred_check
      _
    $region83: #{tpu_custom_call.1} parent=1 // pred_check_branch
      %1551 = sbr.rel (0) target = $region85
    $region84: #{tpu_custom_call.1} parent=1 // pred_region
      %1553 = dma.done [#allocation5], 128
    $region85: #{tpu_custom_call.1} parent=1 // pred_fallthru
      _
    %1554 = vsyncpa [#allocation4], 1
    %1555 = vsyncpa [#allocation7], 1
    %1556 = vsyncpa [#allocation5], 1

</llo_original>
